<compile_context>
chip_gen: v5e
topology: v5e:2x2
jax: 0.10.0
libtpu: 0.0.40
codegen_flags: <defaults>
</compile_context>

<pallas_src>
import functools

import jax
import jax.numpy as jnp
from jax.experimental import pallas as pl
from jax.experimental.pallas import tpu as pltpu

EPS = 1e-12


def _round_up(x, m):
    return (x + m - 1) // m * m


# ----------------------------- Pallas kernel -----------------------------

def _cossim_kernel(p_ref, w_ref, *rest, has_residual):
    """Grid = (M tiles, K tiles).  K axis is a reduction ("arbitrary").

    w_ref already carries the per-filter 1/||w|| factor (folded in the wrapper)."""
    if has_residual:
        r_ref, o_ref, acc_ref, sq_ref = rest
    else:
        o_ref, acc_ref, sq_ref = rest

    k = pl.program_id(1)

    @pl.when(k == 0)
    def _init():
        acc_ref[...] = jnp.zeros_like(acc_ref)
        sq_ref[...] = jnp.zeros_like(sq_ref)

    p = p_ref[...]                                              # (tm, tk) bf16
    # MXU: bf16 x bf16 -> f32 accumulate.
    acc_ref[...] += jnp.dot(p, w_ref[...], preferred_element_type=jnp.float32)
    # Patch sum-of-squares, accumulated in f32 across K tiles (f32 square keeps v5e
    # happy — no bf16 VALU there — and is filler under the MXU for wide Cout).
    pf = p.astype(jnp.float32)
    sq_ref[...] += jnp.sum(pf * pf, axis=-1, keepdims=True)     # (tm, 1)

    @pl.when(k == pl.num_programs(1) - 1)
    def _finalize():
        # 1/max(||patch||, eps) == rsqrt(max(sum_sq, eps^2))  -> EUP slot.
        inv_p = jax.lax.rsqrt(jnp.maximum(sq_ref[...], EPS * EPS))
        out = acc_ref[...] * inv_p                              # (tm, Cout_pad) f32
        if has_residual:
            out = out + r_ref[...].astype(jnp.float32)
        o_ref[...] = out.astype(o_ref.dtype)


# --------------------------- tiling / VMEM budget ---------------------------

def _vmem_capacity_bytes():
    """Per-core VMEM capacity; conservative 64 MiB (v7x) if the query fails."""
    try:
        info = pltpu.get_tpu_info()
        cap = getattr(info, "vmem_capacity_bytes", None)
        if cap:
            return int(cap)
    except Exception:
        pass
    return 64 * 1024 * 1024


def _choose_tiling(M, K, Cout_pad, out_bytes, has_residual):
    """Pick (tm, tk, vmem_limit) from the device's actual VMEM capacity."""
    vmem_cap = _vmem_capacity_bytes()
    budget = int(vmem_cap * 0.55)          # headroom for compiler scratch / spills

    # Keep the whole filter resident in VMEM when it is small (always true at real
    # ResNet widths): constant block index => Pallas DMAs it only once.
    w_bytes = K * Cout_pad * 2
    if w_bytes <= min(budget // 4, 16 * 1024 * 1024):
        tk = K
    else:
        tk = min(512, _round_up(K, 128))   # streamed fallback (K gets zero-padded)

    weight_vmem = 2 * tk * Cout_pad * 2    # assume double-buffered (conservative)
    m_cap = _round_up(M, 8)

    tm = 8
    for cand in (1024, 768, 512, 384, 256, 128, 64, 32, 16, 8):
        cand = min(cand, m_cap)
        use = (2 * cand * tk * 2                       # bf16 patches, double-buffered
               + weight_vmem
               + 2 * cand * Cout_pad * out_bytes       # output, double-buffered
               + (2 * cand * Cout_pad * 2 if has_residual else 0)   # bf16 residual
               + cand * Cout_pad * 4                   # f32 accumulator scratch
               + cand * 512)                           # (tm,1) f32 scratch, lane-padded
        if use <= budget:
            tm = cand
            break

    vmem_limit = int(min(vmem_cap * 0.75, 100 * 1024 * 1024))
    return tm, tk, vmem_limit


def _cossim_matmul(patches, w_kc, residual=None, out_dtype=jnp.float32):
    """patches: (M, K) bf16, w_kc: (K, Cout_pad) bf16 (already scaled by 1/||w||),
    residual: optional (M, Cout_pad) bf16.  Returns (M, Cout_pad) out_dtype."""
    M, K = patches.shape
    Cout_pad = w_kc.shape[1]
    out_bytes = jnp.dtype(out_dtype).itemsize

    tm, tk, vmem_limit = _choose_tiling(M, K, Cout_pad, out_bytes, residual is not None)

    if tk != K and K % tk != 0:
        # Streamed-filter fallback for very large K: zero-pad K so it tiles cleanly.
        # Zero rows are numerically inert for both the dot and the sum-of-squares.
        K_pad = _round_up(K, tk)
        patches = jnp.pad(patches, ((0, 0), (0, K_pad - K)))
        w_kc = jnp.pad(w_kc, ((0, K_pad - K), (0, 0)))
        K = K_pad

    grid = (pl.cdiv(M, tm), pl.cdiv(K, tk))

    in_specs = [
        pl.BlockSpec((tm, tk), lambda i, k: (i, k)),        # patches
        pl.BlockSpec((tk, Cout_pad), lambda i, k: (k, 0)),  # filters (constant when tk==K)
    ]
    args = [patches, w_kc]
    if residual is not None:
        in_specs.append(pl.BlockSpec((tm, Cout_pad), lambda i, k: (i, 0)))
        args.append(residual)

    kernel = functools.partial(_cossim_kernel, has_residual=residual is not None)

    # No M padding / output slicing: Pallas masks the ragged last M block.
    return pl.pallas_call(
        kernel,
        grid=grid,
        in_specs=in_specs,
        out_specs=pl.BlockSpec((tm, Cout_pad), lambda i, k: (i, 0)),
        out_shape=jax.ShapeDtypeStruct((M, Cout_pad), out_dtype),
        scratch_shapes=[
            pltpu.VMEM((tm, Cout_pad), jnp.float32),   # dot accumulator
            pltpu.VMEM((tm, 1), jnp.float32),          # patch sum-of-squares
        ],
        compiler_params=pltpu.CompilerParams(
            dimension_semantics=("parallel", "arbitrary"),
            vmem_limit_bytes=vmem_limit,
        ),
    )(*args)


# ------------------------------- JAX glue ---------------------------------

def _extract_patches(x_nhwc, k, stride, padding):
    """im2col: returns (N*Ho*Wo, k*k*C) with patch element order (kH, kW, Cin)."""
    N, H, W, C = x_nhwc.shape
    if padding > 0:
        x_nhwc = jnp.pad(x_nhwc, ((0, 0), (padding, padding), (padding, padding), (0, 0)))
    Ho = (H + 2 * padding - k) // stride + 1
    Wo = (W + 2 * padding - k) // stride + 1
    cols = []
    for dh in range(k):
        for dw in range(k):
            cols.append(
                x_nhwc[:, dh:dh + stride * (Ho - 1) + 1:stride,
                       dw:dw + stride * (Wo - 1) + 1:stride, :]
            )
    patches = jnp.concatenate(cols, axis=-1)              # (N, Ho, Wo, k*k*C)
    return patches.reshape(N * Ho * Wo, k * k * C), (N, Ho, Wo)


def cossim_conv2d(x_nhwc, weight, k, stride=1, padding=0, residual_nhwc=None,
                  out_dtype=jnp.float32):
    """weight: (Cout, kH, kW, Cin). Cosine-similarity conv via the Pallas kernel."""
    Cout = weight.shape[0]
    Cout_pad = _round_up(Cout, 128)   # lane-dense output stores (no-op for real widths)

    # bf16 patches (halves im2col HBM traffic and feeds the MXU natively).
    patches, (N, Ho, Wo) = _extract_patches(x_nhwc.astype(jnp.bfloat16), k, stride, padding)
    M = patches.shape[0]

    # Per-filter inverse L2 norm folded into the filters (f32 math, then bf16 cast).
    # Padded Cout columns stay zero -> zero output (sliced off below).
    w_kc = weight.reshape(Cout, -1).T.astype(jnp.float32)            # (K, Cout)
    inv_w = jax.lax.rsqrt(jnp.maximum(jnp.sum(w_kc * w_kc, axis=0, keepdims=True),
                                      EPS * EPS))                    # (1, Cout)
    w_kc = (w_kc * inv_w).astype(jnp.bfloat16)
    if Cout_pad != Cout:
        w_kc = jnp.pad(w_kc, ((0, 0), (0, Cout_pad - Cout)))

    res = None
    if residual_nhwc is not None:
        # Residual streamed in bf16 (added in f32 inside the kernel).
        res = residual_nhwc.reshape(M, Cout).astype(jnp.bfloat16)
        if Cout_pad != Cout:
            res = jnp.pad(res, ((0, 0), (0, Cout_pad - Cout)))

    out = _cossim_matmul(patches, w_kc, residual=res, out_dtype=out_dtype)
    if Cout_pad != Cout:
        out = out[:, :Cout]
    return out.reshape(N, Ho, Wo, Cout)


class BottleneckPallas:
    expansion = 4

    def __init__(self, inplanes, planes, stride=1, downsample=None, base_width=64,
                 key=jax.random.PRNGKey(0)):
        width = int(planes * (base_width / 64.0))
        k1, k2, k3 = jax.random.split(key, 3)
        # Deterministic synthetic weights; layout (Cout, kH, kW, Cin).
        self.w1 = 0.1 * jax.random.normal(k1, (width, 1, 1, inplanes), jnp.float32)
        self.w2 = 0.1 * jax.random.normal(k2, (width, 3, 3, width), jnp.float32)
        self.w3 = 0.1 * jax.random.normal(k3, (planes * self.expansion, 1, 1, width),
                                          jnp.float32)
        self.stride = stride
        self.downsample = downsample  # None in this synthetic setup

    def __call__(self, x_nchw):
        x = jnp.transpose(x_nchw, (0, 2, 3, 1))            # NCHW -> NHWC
        identity = x
        # TODO(synk): downsample branch not provided (None); residual requires
        # stride == 1 and inplanes == planes * expansion.
        if self.downsample is None and (self.stride != 1
                                        or x.shape[-1] != self.w3.shape[0]):
            raise NotImplementedError(
                "residual without downsample needs stride==1 and matching channels")
        # Intermediate activations and conv3's output stay bf16 (halves HBM traffic);
        # the final result is cast back to f32 only after the layout transpose.
        out = cossim_conv2d(x, self.w1, k=1, stride=1, padding=0,
                            out_dtype=jnp.bfloat16)
        out = cossim_conv2d(out, self.w2, k=3, stride=self.stride, padding=1,
                            out_dtype=jnp.bfloat16)
        out = cossim_conv2d(out, self.w3, k=1, stride=1, padding=0,
                            residual_nhwc=identity, out_dtype=jnp.bfloat16)
        return jnp.transpose(out, (0, 3, 1, 2)).astype(jnp.float32)   # NHWC -> NCHW


# ------------------------- pure-JAX f32 reference --------------------------

def _cossim_ref(x_nhwc, weight, k, stride, padding):
    Cout = weight.shape[0]
    patches, (N, Ho, Wo) = _extract_patches(x_nhwc.astype(jnp.float32), k, stride, padding)
    w_kc = weight.reshape(Cout, -1).T.astype(jnp.float32)
    dot = patches @ w_kc
    p_n = jnp.maximum(jnp.sqrt(jnp.sum(patches * patches, -1, keepdims=True)), EPS)
    w_n = jnp.maximum(jnp.sqrt(jnp.sum(w_kc * w_kc, 0, keepdims=True)), EPS)
    return (dot / (p_n * w_n)).reshape(N, Ho, Wo, Cout)


def _reference_bottleneck(x_nchw, block):
    x = jnp.transpose(x_nchw, (0, 2, 3, 1)).astype(jnp.float32)
    out = _cossim_ref(x, block.w1, 1, 1, 0)
    out = _cossim_ref(out, block.w2, 3, block.stride, 1)
    out = _cossim_ref(out, block.w3, 1, 1, 0) + x
    return jnp.transpose(out, (0, 3, 1, 2))


# --------------------------------- main ------------------------------------

if __name__ == "__main__":
    key = jax.random.PRNGKey(0)
    kx, kw = jax.random.split(key)

    # inplanes must equal planes*expansion for the residual add (no downsample).
    N, inplanes, H, W = 2, 16, 8, 8
    planes = 4
    x = jax.random.normal(kx, (N, inplanes, H, W), jnp.float32)

    block = BottleneckPallas(inplanes=inplanes, planes=planes, stride=1,
                             downsample=None, key=kw)
    fwd = jax.jit(block.__call__)
    y = fwd(x)
    jax.block_until_ready(y)
    assert y.shape == (N, planes * BottleneckPallas.expansion, H, W), y.shape

    # Loose-tolerance check vs. a pure-f32 XLA reference (kernel uses bf16 MXU inputs,
    # bf16 residual/output).
    y_ref = _reference_bottleneck(x, block)
    max_err = float(jnp.max(jnp.abs(y - y_ref)))
    assert max_err < 0.1, max_err

    print("KERNEL_OK")
</pallas_src>

<mosaic_0001>
module attributes {stable_mosaic.version = 11 : i64} {
  func.func @_cossim_kernel(%arg0: i32, %arg1: i32, %arg2: memref<128x16xbf16, #tpu.memory_space<vmem>>, %arg3: memref<16x128xbf16, #tpu.memory_space<vmem>>, %arg4: memref<128x128xbf16, #tpu.memory_space<vmem>>, %arg5: memref<128x128xf32, #tpu.memory_space<vmem>>, %arg6: memref<128x1xf32, #tpu.memory_space<vmem>>) attributes {dimension_semantics = [#tpu.dimension_semantics<parallel>, #tpu.dimension_semantics<arbitrary>], iteration_bounds = array<i64: 1, 1>, scalar_prefetch = 0 : i64, scratch_operands = 2 : i64, tpu.core_type = #tpu.core_type<tc>, window_params = [{transform_indices = @transform_0, window_bounds = array<i64: 128, 16>}, {transform_indices = @transform_1, window_bounds = array<i64: 16, 128>}, {transform_indices = @transform_2, window_bounds = array<i64: 128, 128>}]} {
    %c0_i32 = arith.constant 0 : i32
    %0 = arith.cmpi eq, %arg1, %c0_i32 : i32
    %1 = arith.extui %0 : i1 to i32
    %c0_i32_0 = arith.constant 0 : i32
    %2 = arith.cmpi ne, %1, %c0_i32_0 : i32
    scf.if %2 {
      %cst_15 = arith.constant 0.000000e+00 : f32
      %19 = vector.broadcast %cst_15 : f32 to vector<128x128xf32>
      %c0_16 = arith.constant 0 : index
      %c0_17 = arith.constant 0 : index
      %20 = vector.load %arg5[%c0_16, %c0_17] : memref<128x128xf32, #tpu.memory_space<vmem>>, vector<128x128xf32>
      tpu.vector_store %arg5[%c0_16, %c0_17], %19 {strides = array<i32>} : memref<128x128xf32, #tpu.memory_space<vmem>>, vector<128x128xf32>,
      %cst_18 = arith.constant 0.000000e+00 : f32
      %21 = vector.broadcast %cst_18 : f32 to vector<128x1xf32>
      %c0_19 = arith.constant 0 : index
      %c0_20 = arith.constant 0 : index
      %22 = vector.load %arg6[%c0_19, %c0_20] : memref<128x1xf32, #tpu.memory_space<vmem>>, vector<128x1xf32>
      tpu.vector_store %arg6[%c0_19, %c0_20], %21 {strides = array<i32>} : memref<128x1xf32, #tpu.memory_space<vmem>>, vector<128x1xf32>,
    } else {
    }
    %c0 = arith.constant 0 : index
    %c0_1 = arith.constant 0 : index
    %3 = vector.load %arg2[%c0, %c0_1] : memref<128x16xbf16, #tpu.memory_space<vmem>>, vector<128x16xbf16>
    %c0_2 = arith.constant 0 : index
    %c0_3 = arith.constant 0 : index
    %4 = vector.load %arg5[%c0_2, %c0_3] : memref<128x128xf32, #tpu.memory_space<vmem>>, vector<128x128xf32>
    %c0_4 = arith.constant 0 : index
    %c0_5 = arith.constant 0 : index
    %5 = vector.load %arg3[%c0_4, %c0_5] : memref<16x128xbf16, #tpu.memory_space<vmem>>, vector<16x128xbf16>
    %cst = arith.constant dense<0.000000e+00> : vector<128x128xf32>
    %6 = tpu.matmul %3, %5, %cst {dimension_numbers = #tpu.dot_dimension_numbers<[1], [0], [0], [1], [0, 0, 1, 1], [], []>} : vector<128x16xbf16>, vector<16x128xbf16>, vector<128x128xf32> -> vector<128x128xf32>
    %7 = arith.addf %4, %6 : vector<128x128xf32>
    %c0_6 = arith.constant 0 : index
    %c0_7 = arith.constant 0 : index
    %8 = vector.load %arg5[%c0_6, %c0_7] : memref<128x128xf32, #tpu.memory_space<vmem>>, vector<128x128xf32>
    tpu.vector_store %arg5[%c0_6, %c0_7], %7 {strides = array<i32>} : memref<128x128xf32, #tpu.memory_space<vmem>>, vector<128x128xf32>,
    %9 = arith.extf %3 : vector<128x16xbf16> to vector<128x16xf32>
    %c0_8 = arith.constant 0 : index
    %c0_9 = arith.constant 0 : index
    %10 = vector.load %arg6[%c0_8, %c0_9] : memref<128x1xf32, #tpu.memory_space<vmem>>, vector<128x1xf32>
    %11 = arith.mulf %9, %9 : vector<128x16xf32>
    %cst_10 = arith.constant dense<0.000000e+00> : vector<128xf32>
    %12 = vector.multi_reduction <add>, %11, %cst_10 [1] : vector<128x16xf32> to vector<128xf32>
    %13 = vector.shape_cast %12 : vector<128xf32> to vector<128x1xf32>
    %14 = arith.addf %10, %13 : vector<128x1xf32>
    %c0_11 = arith.constant 0 : index
    %c0_12 = arith.constant 0 : index
    %15 = vector.load %arg6[%c0_11, %c0_12] : memref<128x1xf32, #tpu.memory_space<vmem>>, vector<128x1xf32>
    tpu.vector_store %arg6[%c0_11, %c0_12], %14 {strides = array<i32>} : memref<128x1xf32, #tpu.memory_space<vmem>>, vector<128x1xf32>,
    %c0_i32_13 = arith.constant 0 : i32
    %16 = arith.cmpi eq, %arg1, %c0_i32_13 : i32
    %17 = arith.extui %16 : i1 to i32
    %c0_i32_14 = arith.constant 0 : i32
    %18 = arith.cmpi ne, %17, %c0_i32_14 : i32
    scf.if %18 {
      %c0_15 = arith.constant 0 : index
      %c0_16 = arith.constant 0 : index
      %19 = vector.load %arg6[%c0_15, %c0_16] : memref<128x1xf32, #tpu.memory_space<vmem>>, vector<128x1xf32>
      %cst_17 = arith.constant 1.000000e-24 : f32
      %20 = vector.broadcast %cst_17 : f32 to vector<128x1xf32>
      %21 = arith.maximumf %19, %20 : vector<128x1xf32>
      %22 = math.rsqrt %21 : vector<128x1xf32>
      %c0_18 = arith.constant 0 : index
      %c0_19 = arith.constant 0 : index
      %23 = vector.load %arg5[%c0_18, %c0_19] : memref<128x128xf32, #tpu.memory_space<vmem>>, vector<128x128xf32>
      %24 = vector.broadcast %22 : vector<128x1xf32> to vector<128x128xf32>
      %25 = arith.mulf %23, %24 : vector<128x128xf32>
      %26 = arith.truncf %25 : vector<128x128xf32> to vector<128x128xbf16>
      %c0_20 = arith.constant 0 : index
      %c0_21 = arith.constant 0 : index
      %27 = vector.load %arg4[%c0_20, %c0_21] : memref<128x128xbf16, #tpu.memory_space<vmem>>, vector<128x128xbf16>
      tpu.vector_store %arg4[%c0_20, %c0_21], %26 {strides = array<i32>} : memref<128x128xbf16, #tpu.memory_space<vmem>>, vector<128x128xbf16>,
    } else {
    }
    return
  }
  func.func @transform_0(%arg0: i32, %arg1: i32) -> (i32, i32) {
    %c0_i32 = arith.constant 0 : i32
    return %arg0, %arg1 : i32, i32
  }
  func.func @transform_1(%arg0: i32, %arg1: i32) -> (i32, i32) {
    %c0_i32 = arith.constant 0 : i32
    %c0_i32_0 = arith.constant 0 : i32
    return %arg1, %c0_i32 : i32, i32
  }
  func.func @transform_2(%arg0: i32, %arg1: i32) -> (i32, i32) {
    %c0_i32 = arith.constant 0 : i32
    %c0_i32_0 = arith.constant 0 : i32
    return %arg0, %c0_i32 : i32, i32
  }
}

module attributes {stable_mosaic.version = 11 : i64} {
  func.func @_cossim_kernel(%arg0: i32, %arg1: i32, %arg2: memref<128x36xbf16, #tpu.memory_space<vmem>>, %arg3: memref<36x128xbf16, #tpu.memory_space<vmem>>, %arg4: memref<128x128xbf16, #tpu.memory_space<vmem>>, %arg5: memref<128x128xf32, #tpu.memory_space<vmem>>, %arg6: memref<128x1xf32, #tpu.memory_space<vmem>>) attributes {dimension_semantics = [#tpu.dimension_semantics<parallel>, #tpu.dimension_semantics<arbitrary>], iteration_bounds = array<i64: 1, 1>, scalar_prefetch = 0 : i64, scratch_operands = 2 : i64, tpu.core_type = #tpu.core_type<tc>, window_params = [{transform_indices = @transform_0, window_bounds = array<i64: 128, 36>}, {transform_indices = @transform_1, window_bounds = array<i64: 36, 128>}, {transform_indices = @transform_2, window_bounds = array<i64: 128, 128>}]} {
    %c0_i32 = arith.constant 0 : i32
    %0 = arith.cmpi eq, %arg1, %c0_i32 : i32
    %1 = arith.extui %0 : i1 to i32
    %c0_i32_0 = arith.constant 0 : i32
    %2 = arith.cmpi ne, %1, %c0_i32_0 : i32
    scf.if %2 {
      %cst_15 = arith.constant 0.000000e+00 : f32
      %19 = vector.broadcast %cst_15 : f32 to vector<128x128xf32>
      %c0_16 = arith.constant 0 : index
      %c0_17 = arith.constant 0 : index
      %20 = vector.load %arg5[%c0_16, %c0_17] : memref<128x128xf32, #tpu.memory_space<vmem>>, vector<128x128xf32>
      tpu.vector_store %arg5[%c0_16, %c0_17], %19 {strides = array<i32>} : memref<128x128xf32, #tpu.memory_space<vmem>>, vector<128x128xf32>,
      %cst_18 = arith.constant 0.000000e+00 : f32
      %21 = vector.broadcast %cst_18 : f32 to vector<128x1xf32>
      %c0_19 = arith.constant 0 : index
      %c0_20 = arith.constant 0 : index
      %22 = vector.load %arg6[%c0_19, %c0_20] : memref<128x1xf32, #tpu.memory_space<vmem>>, vector<128x1xf32>
      tpu.vector_store %arg6[%c0_19, %c0_20], %21 {strides = array<i32>} : memref<128x1xf32, #tpu.memory_space<vmem>>, vector<128x1xf32>,
    } else {
    }
    %c0 = arith.constant 0 : index
    %c0_1 = arith.constant 0 : index
    %3 = vector.load %arg2[%c0, %c0_1] : memref<128x36xbf16, #tpu.memory_space<vmem>>, vector<128x36xbf16>
    %c0_2 = arith.constant 0 : index
    %c0_3 = arith.constant 0 : index
    %4 = vector.load %arg5[%c0_2, %c0_3] : memref<128x128xf32, #tpu.memory_space<vmem>>, vector<128x128xf32>
    %c0_4 = arith.constant 0 : index
    %c0_5 = arith.constant 0 : index
    %5 = vector.load %arg3[%c0_4, %c0_5] : memref<36x128xbf16, #tpu.memory_space<vmem>>, vector<36x128xbf16>
    %cst = arith.constant dense<0.000000e+00> : vector<128x128xf32>
    %6 = tpu.matmul %3, %5, %cst {dimension_numbers = #tpu.dot_dimension_numbers<[1], [0], [0], [1], [0, 0, 1, 1], [], []>} : vector<128x36xbf16>, vector<36x128xbf16>, vector<128x128xf32> -> vector<128x128xf32>
    %7 = arith.addf %4, %6 : vector<128x128xf32>
    %c0_6 = arith.constant 0 : index
    %c0_7 = arith.constant 0 : index
    %8 = vector.load %arg5[%c0_6, %c0_7] : memref<128x128xf32, #tpu.memory_space<vmem>>, vector<128x128xf32>
    tpu.vector_store %arg5[%c0_6, %c0_7], %7 {strides = array<i32>} : memref<128x128xf32, #tpu.memory_space<vmem>>, vector<128x128xf32>,
    %9 = arith.extf %3 : vector<128x36xbf16> to vector<128x36xf32>
    %c0_8 = arith.constant 0 : index
    %c0_9 = arith.constant 0 : index
    %10 = vector.load %arg6[%c0_8, %c0_9] : memref<128x1xf32, #tpu.memory_space<vmem>>, vector<128x1xf32>
    %11 = arith.mulf %9, %9 : vector<128x36xf32>
    %cst_10 = arith.constant dense<0.000000e+00> : vector<128xf32>
    %12 = vector.multi_reduction <add>, %11, %cst_10 [1] : vector<128x36xf32> to vector<128xf32>
    %13 = vector.shape_cast %12 : vector<128xf32> to vector<128x1xf32>
    %14 = arith.addf %10, %13 : vector<128x1xf32>
    %c0_11 = arith.constant 0 : index
    %c0_12 = arith.constant 0 : index
    %15 = vector.load %arg6[%c0_11, %c0_12] : memref<128x1xf32, #tpu.memory_space<vmem>>, vector<128x1xf32>
    tpu.vector_store %arg6[%c0_11, %c0_12], %14 {strides = array<i32>} : memref<128x1xf32, #tpu.memory_space<vmem>>, vector<128x1xf32>,
    %c0_i32_13 = arith.constant 0 : i32
    %16 = arith.cmpi eq, %arg1, %c0_i32_13 : i32
    %17 = arith.extui %16 : i1 to i32
    %c0_i32_14 = arith.constant 0 : i32
    %18 = arith.cmpi ne, %17, %c0_i32_14 : i32
    scf.if %18 {
      %c0_15 = arith.constant 0 : index
      %c0_16 = arith.constant 0 : index
      %19 = vector.load %arg6[%c0_15, %c0_16] : memref<128x1xf32, #tpu.memory_space<vmem>>, vector<128x1xf32>
      %cst_17 = arith.constant 1.000000e-24 : f32
      %20 = vector.broadcast %cst_17 : f32 to vector<128x1xf32>
      %21 = arith.maximumf %19, %20 : vector<128x1xf32>
      %22 = math.rsqrt %21 : vector<128x1xf32>
      %c0_18 = arith.constant 0 : index
      %c0_19 = arith.constant 0 : index
      %23 = vector.load %arg5[%c0_18, %c0_19] : memref<128x128xf32, #tpu.memory_space<vmem>>, vector<128x128xf32>
      %24 = vector.broadcast %22 : vector<128x1xf32> to vector<128x128xf32>
      %25 = arith.mulf %23, %24 : vector<128x128xf32>
      %26 = arith.truncf %25 : vector<128x128xf32> to vector<128x128xbf16>
      %c0_20 = arith.constant 0 : index
      %c0_21 = arith.constant 0 : index
      %27 = vector.load %arg4[%c0_20, %c0_21] : memref<128x128xbf16, #tpu.memory_space<vmem>>, vector<128x128xbf16>
      tpu.vector_store %arg4[%c0_20, %c0_21], %26 {strides = array<i32>} : memref<128x128xbf16, #tpu.memory_space<vmem>>, vector<128x128xbf16>,
    } else {
    }
    return
  }
  func.func @transform_0(%arg0: i32, %arg1: i32) -> (i32, i32) {
    %c0_i32 = arith.constant 0 : i32
    return %arg0, %arg1 : i32, i32
  }
  func.func @transform_1(%arg0: i32, %arg1: i32) -> (i32, i32) {
    %c0_i32 = arith.constant 0 : i32
    %c0_i32_0 = arith.constant 0 : i32
    return %arg1, %c0_i32 : i32, i32
  }
  func.func @transform_2(%arg0: i32, %arg1: i32) -> (i32, i32) {
    %c0_i32 = arith.constant 0 : i32
    %c0_i32_0 = arith.constant 0 : i32
    return %arg0, %c0_i32 : i32, i32
  }
}

module attributes {stable_mosaic.version = 11 : i64} {
  func.func @_cossim_kernel(%arg0: i32, %arg1: i32, %arg2: memref<128x4xbf16, #tpu.memory_space<vmem>>, %arg3: memref<4x128xbf16, #tpu.memory_space<vmem>>, %arg4: memref<128x128xbf16, #tpu.memory_space<vmem>>, %arg5: memref<128x128xbf16, #tpu.memory_space<vmem>>, %arg6: memref<128x128xf32, #tpu.memory_space<vmem>>, %arg7: memref<128x1xf32, #tpu.memory_space<vmem>>) attributes {dimension_semantics = [#tpu.dimension_semantics<parallel>, #tpu.dimension_semantics<arbitrary>], iteration_bounds = array<i64: 1, 1>, scalar_prefetch = 0 : i64, scratch_operands = 2 : i64, tpu.core_type = #tpu.core_type<tc>, window_params = [{transform_indices = @transform_0, window_bounds = array<i64: 128, 4>}, {transform_indices = @transform_1, window_bounds = array<i64: 4, 128>}, {transform_indices = @transform_2, window_bounds = array<i64: 128, 128>}, {transform_indices = @transform_3, window_bounds = array<i64: 128, 128>}]} {
    %c0_i32 = arith.constant 0 : i32
    %0 = arith.cmpi eq, %arg1, %c0_i32 : i32
    %1 = arith.extui %0 : i1 to i32
    %c0_i32_0 = arith.constant 0 : i32
    %2 = arith.cmpi ne, %1, %c0_i32_0 : i32
    scf.if %2 {
      %cst_15 = arith.constant 0.000000e+00 : f32
      %19 = vector.broadcast %cst_15 : f32 to vector<128x128xf32>
      %c0_16 = arith.constant 0 : index
      %c0_17 = arith.constant 0 : index
      %20 = vector.load %arg6[%c0_16, %c0_17] : memref<128x128xf32, #tpu.memory_space<vmem>>, vector<128x128xf32>
      tpu.vector_store %arg6[%c0_16, %c0_17], %19 {strides = array<i32>} : memref<128x128xf32, #tpu.memory_space<vmem>>, vector<128x128xf32>,
      %cst_18 = arith.constant 0.000000e+00 : f32
      %21 = vector.broadcast %cst_18 : f32 to vector<128x1xf32>
      %c0_19 = arith.constant 0 : index
      %c0_20 = arith.constant 0 : index
      %22 = vector.load %arg7[%c0_19, %c0_20] : memref<128x1xf32, #tpu.memory_space<vmem>>, vector<128x1xf32>
      tpu.vector_store %arg7[%c0_19, %c0_20], %21 {strides = array<i32>} : memref<128x1xf32, #tpu.memory_space<vmem>>, vector<128x1xf32>,
    } else {
    }
    %c0 = arith.constant 0 : index
    %c0_1 = arith.constant 0 : index
    %3 = vector.load %arg2[%c0, %c0_1] : memref<128x4xbf16, #tpu.memory_space<vmem>>, vector<128x4xbf16>
    %c0_2 = arith.constant 0 : index
    %c0_3 = arith.constant 0 : index
    %4 = vector.load %arg6[%c0_2, %c0_3] : memref<128x128xf32, #tpu.memory_space<vmem>>, vector<128x128xf32>
    %c0_4 = arith.constant 0 : index
    %c0_5 = arith.constant 0 : index
    %5 = vector.load %arg3[%c0_4, %c0_5] : memref<4x128xbf16, #tpu.memory_space<vmem>>, vector<4x128xbf16>
    %cst = arith.constant dense<0.000000e+00> : vector<128x128xf32>
    %6 = tpu.matmul %3, %5, %cst {dimension_numbers = #tpu.dot_dimension_numbers<[1], [0], [0], [1], [0, 0, 1, 1], [], []>} : vector<128x4xbf16>, vector<4x128xbf16>, vector<128x128xf32> -> vector<128x128xf32>
    %7 = arith.addf %4, %6 : vector<128x128xf32>
    %c0_6 = arith.constant 0 : index
    %c0_7 = arith.constant 0 : index
    %8 = vector.load %arg6[%c0_6, %c0_7] : memref<128x128xf32, #tpu.memory_space<vmem>>, vector<128x128xf32>
    tpu.vector_store %arg6[%c0_6, %c0_7], %7 {strides = array<i32>} : memref<128x128xf32, #tpu.memory_space<vmem>>, vector<128x128xf32>,
    %9 = arith.extf %3 : vector<128x4xbf16> to vector<128x4xf32>
    %c0_8 = arith.constant 0 : index
    %c0_9 = arith.constant 0 : index
    %10 = vector.load %arg7[%c0_8, %c0_9] : memref<128x1xf32, #tpu.memory_space<vmem>>, vector<128x1xf32>
    %11 = arith.mulf %9, %9 : vector<128x4xf32>
    %cst_10 = arith.constant dense<0.000000e+00> : vector<128xf32>
    %12 = vector.multi_reduction <add>, %11, %cst_10 [1] : vector<128x4xf32> to vector<128xf32>
    %13 = vector.shape_cast %12 : vector<128xf32> to vector<128x1xf32>
    %14 = arith.addf %10, %13 : vector<128x1xf32>
    %c0_11 = arith.constant 0 : index
    %c0_12 = arith.constant 0 : index
    %15 = vector.load %arg7[%c0_11, %c0_12] : memref<128x1xf32, #tpu.memory_space<vmem>>, vector<128x1xf32>
    tpu.vector_store %arg7[%c0_11, %c0_12], %14 {strides = array<i32>} : memref<128x1xf32, #tpu.memory_space<vmem>>, vector<128x1xf32>,
    %c0_i32_13 = arith.constant 0 : i32
    %16 = arith.cmpi eq, %arg1, %c0_i32_13 : i32
    %17 = arith.extui %16 : i1 to i32
    %c0_i32_14 = arith.constant 0 : i32
    %18 = arith.cmpi ne, %17, %c0_i32_14 : i32
    scf.if %18 {
      %c0_15 = arith.constant 0 : index
      %c0_16 = arith.constant 0 : index
      %19 = vector.load %arg7[%c0_15, %c0_16] : memref<128x1xf32, #tpu.memory_space<vmem>>, vector<128x1xf32>
      %cst_17 = arith.constant 1.000000e-24 : f32
      %20 = vector.broadcast %cst_17 : f32 to vector<128x1xf32>
      %21 = arith.maximumf %19, %20 : vector<128x1xf32>
      %22 = math.rsqrt %21 : vector<128x1xf32>
      %c0_18 = arith.constant 0 : index
      %c0_19 = arith.constant 0 : index
      %23 = vector.load %arg6[%c0_18, %c0_19] : memref<128x128xf32, #tpu.memory_space<vmem>>, vector<128x128xf32>
      %24 = vector.broadcast %22 : vector<128x1xf32> to vector<128x128xf32>
      %25 = arith.mulf %23, %24 : vector<128x128xf32>
      %c0_20 = arith.constant 0 : index
      %c0_21 = arith.constant 0 : index
      %26 = vector.load %arg4[%c0_20, %c0_21] : memref<128x128xbf16, #tpu.memory_space<vmem>>, vector<128x128xbf16>
      %27 = arith.extf %26 : vector<128x128xbf16> to vector<128x128xf32>
      %28 = arith.addf %25, %27 : vector<128x128xf32>
      %29 = arith.truncf %28 : vector<128x128xf32> to vector<128x128xbf16>
      %c0_22 = arith.constant 0 : index
      %c0_23 = arith.constant 0 : index
      %30 = vector.load %arg5[%c0_22, %c0_23] : memref<128x128xbf16, #tpu.memory_space<vmem>>, vector<128x128xbf16>
      tpu.vector_store %arg5[%c0_22, %c0_23], %29 {strides = array<i32>} : memref<128x128xbf16, #tpu.memory_space<vmem>>, vector<128x128xbf16>,
    } else {
    }
    return
  }
  func.func @transform_0(%arg0: i32, %arg1: i32) -> (i32, i32) {
    %c0_i32 = arith.constant 0 : i32
    return %arg0, %arg1 : i32, i32
  }
  func.func @transform_1(%arg0: i32, %arg1: i32) -> (i32, i32) {
    %c0_i32 = arith.constant 0 : i32
    %c0_i32_0 = arith.constant 0 : i32
    return %arg1, %c0_i32 : i32, i32
  }
  func.func @transform_2(%arg0: i32, %arg1: i32) -> (i32, i32) {
    %c0_i32 = arith.constant 0 : i32
    %c0_i32_0 = arith.constant 0 : i32
    return %arg0, %c0_i32 : i32, i32
  }
  func.func @transform_3(%arg0: i32, %arg1: i32) -> (i32, i32) {
    %c0_i32 = arith.constant 0 : i32
    %c0_i32_0 = arith.constant 0 : i32
    return %arg0, %c0_i32 : i32, i32
  }
}

</mosaic_0001>

<llo_original>
// kernel: a_call__.4
$region0: #{a_call__.4}
  #allocation0 [shape = 'u32[]', space=smem, size = 0x4, offset = 0x4, fixed_abs, tag = 'smem constant byte address 0x4 - core index']
  #allocation1 [shape = 'u32[72,128]{1,0:T(1,128)}', space=vmem, size = 0x9000, scoped, tag = 'internal scratch']
  #allocation2 [shape = 'f32[128,128]{1,0:T(8,128)}', space=vmem, size = 0x10000, scoped, tag = 'scratch operand']
  #allocation3 [shape = 'f32[128,1]{1,0:T(8,128)}', space=vmem, size = 0x10000, scoped, tag = 'scratch operand']
  %s0 = inlined_call_operand.vmem [shape: bf16[128,36], index: 0, kind: input, shape index: {}]
  %s1 = inlined_call_operand.vmem [shape: bf16[36,128], index: 1, kind: input, shape index: {}]
  %s2 = inlined_call_operand.vmem [shape: bf16[128,128], index: 2, kind: output, shape index: {}]
  %s3 = sld [smem:[#allocation0]]
  $region26: #{a_call__.4} parent=0
    _
  %s5 = ssub.s32 1, %s3
  %s6 = scalar_select 0, %s5, %s3
  // Predicated region
  $region2: #{a_call__.4} parent=0 // pred_check
    _
  $region3: #{a_call__.4} parent=0 // pred_check_branch
    %8 = sbr.rel (0) target = $region5
  $region4: #{a_call__.4} parent=0 // pred_region
    _
  $region5: #{a_call__.4} parent=0 // pred_fallthru
    _
  // Predicated region
  $region6: #{a_call__.4} parent=0 // pred_check
    _
  $region7: #{a_call__.4} parent=0 // pred_check_branch
    %10 = sbr.rel (0) target = $region9
  $region8: #{a_call__.4} parent=0 // pred_region
    _
  $region9: #{a_call__.4} parent=0 // pred_fallthru
    _
  %p12 = scmp.eq.s32.totalorder 0, 0
  // Predicated region
  $region10: #{a_call__.4} parent=0 // pred_check
    %p13 = pneg %p12
  $region11: #{a_call__.4} parent=0 // pred_check_branch
    %15 = sbr.rel (%p13) target = $region13
  $region12: #{a_call__.4} parent=0 // pred_region
    %16 = vst [vmem:[#allocation2] sm:$0xff] 0.0
    %17 = vst [vmem:[#allocation2 + $0x8] sm:$0xff] 0.0
    %18 = vst [vmem:[#allocation2 + $0x10] sm:$0xff] 0.0
    %19 = vst [vmem:[#allocation2 + $0x18] sm:$0xff] 0.0
    %20 = vst [vmem:[#allocation2 + $0x20] sm:$0xff] 0.0
    %21 = vst [vmem:[#allocation2 + $0x28] sm:$0xff] 0.0
    %22 = vst [vmem:[#allocation2 + $0x30] sm:$0xff] 0.0
    %23 = vst [vmem:[#allocation2 + $0x38] sm:$0xff] 0.0
    %24 = vst [vmem:[#allocation2 + $0x40] sm:$0xff] 0.0
    %25 = vst [vmem:[#allocation2 + $0x48] sm:$0xff] 0.0
    %26 = vst [vmem:[#allocation2 + $0x50] sm:$0xff] 0.0
    %27 = vst [vmem:[#allocation2 + $0x58] sm:$0xff] 0.0
    %28 = vst [vmem:[#allocation2 + $0x60] sm:$0xff] 0.0
    %29 = vst [vmem:[#allocation2 + $0x68] sm:$0xff] 0.0
    %30 = vst [vmem:[#allocation2 + $0x70] sm:$0xff] 0.0
    %31 = vst [vmem:[#allocation2 + $0x78] sm:$0xff] 0.0
    %vm32 = vcmask 7168
    %33 = vst.msk [vmem:[#allocation3] sm:$0xff] %vm32, 0.0
    %34 = vst.msk [vmem:[#allocation3 + $0x8] sm:$0xff] %vm32, 0.0
    %35 = vst.msk [vmem:[#allocation3 + $0x10] sm:$0xff] %vm32, 0.0
    %36 = vst.msk [vmem:[#allocation3 + $0x18] sm:$0xff] %vm32, 0.0
    %37 = vst.msk [vmem:[#allocation3 + $0x20] sm:$0xff] %vm32, 0.0
    %38 = vst.msk [vmem:[#allocation3 + $0x28] sm:$0xff] %vm32, 0.0
    %39 = vst.msk [vmem:[#allocation3 + $0x30] sm:$0xff] %vm32, 0.0
    %40 = vst.msk [vmem:[#allocation3 + $0x38] sm:$0xff] %vm32, 0.0
    %41 = vst.msk [vmem:[#allocation3 + $0x40] sm:$0xff] %vm32, 0.0
    %42 = vst.msk [vmem:[#allocation3 + $0x48] sm:$0xff] %vm32, 0.0
    %43 = vst.msk [vmem:[#allocation3 + $0x50] sm:$0xff] %vm32, 0.0
    %44 = vst.msk [vmem:[#allocation3 + $0x58] sm:$0xff] %vm32, 0.0
    %45 = vst.msk [vmem:[#allocation3 + $0x60] sm:$0xff] %vm32, 0.0
    %46 = vst.msk [vmem:[#allocation3 + $0x68] sm:$0xff] %vm32, 0.0
    %47 = vst.msk [vmem:[#allocation3 + $0x70] sm:$0xff] %vm32, 0.0
    %48 = vst.msk [vmem:[#allocation3 + $0x78] sm:$0xff] %vm32, 0.0
  $region13: #{a_call__.4} parent=0 // pred_fallthru
    _
  %v49 = vld [vmem:[%s0] sm:$0xf]
  %v50 = vld [vmem:[%s0 + $0x4] sm:$0xf]
  %v51 = vld [vmem:[%s0 + $0x8] sm:$0xf]
  %v52 = vld [vmem:[%s0 + $0xc] sm:$0xf]
  %v53 = vld [vmem:[%s0 + $0x10] sm:$0xf]
  %v54 = vld [vmem:[%s0 + $0x14] sm:$0xf]
  %v55 = vld [vmem:[%s0 + $0x18] sm:$0xf]
  %v56 = vld [vmem:[%s0 + $0x1c] sm:$0xf]
  %v57 = vld [vmem:[%s0 + $0x20] sm:$0xf]
  %v58 = vld [vmem:[%s0 + $0x24] sm:$0xf]
  %v59 = vld [vmem:[%s0 + $0x28] sm:$0xf]
  %v60 = vld [vmem:[%s0 + $0x2c] sm:$0xf]
  %v61 = vld [vmem:[%s0 + $0x30] sm:$0xf]
  %v62 = vld [vmem:[%s0 + $0x34] sm:$0xf]
  %v63 = vld [vmem:[%s0 + $0x38] sm:$0xf]
  %v64 = vld [vmem:[%s0 + $0x3c] sm:$0xf]
  %v65 = vld [vmem:[#allocation2] sm:$0xff]
  %v66 = vld [vmem:[#allocation2 + $0x8] sm:$0xff]
  %v67 = vld [vmem:[#allocation2 + $0x10] sm:$0xff]
  %v68 = vld [vmem:[#allocation2 + $0x18] sm:$0xff]
  %v69 = vld [vmem:[#allocation2 + $0x20] sm:$0xff]
  %v70 = vld [vmem:[#allocation2 + $0x28] sm:$0xff]
  %v71 = vld [vmem:[#allocation2 + $0x30] sm:$0xff]
  %v72 = vld [vmem:[#allocation2 + $0x38] sm:$0xff]
  %v73 = vld [vmem:[#allocation2 + $0x40] sm:$0xff]
  %v74 = vld [vmem:[#allocation2 + $0x48] sm:$0xff]
  %v75 = vld [vmem:[#allocation2 + $0x50] sm:$0xff]
  %v76 = vld [vmem:[#allocation2 + $0x58] sm:$0xff]
  %v77 = vld [vmem:[#allocation2 + $0x60] sm:$0xff]
  %v78 = vld [vmem:[#allocation2 + $0x68] sm:$0xff]
  %v79 = vld [vmem:[#allocation2 + $0x70] sm:$0xff]
  %v80 = vld [vmem:[#allocation2 + $0x78] sm:$0xff]
  %v81 = vld [vmem:[%s1] sm:$0xf]
  %v82 = vld [vmem:[%s1 + $0x4] sm:$0xf]
  %v83 = vld [vmem:[%s1 + $0x8] sm:$0xf]
  %v84 = vld [vmem:[%s1 + $0xc] sm:$0xf]
  %v85 = vld [vmem:[%s1 + $0x10] sm:$0x3]
  %v102 = vunpack.c.l.b16 %v49
  %v103 = vunpack.c.l.b16 %v50
  %v104 = vunpack.c.l.b16 %v51
  %v105 = vunpack.c.l.b16 %v52
  %v106 = vunpack.c.l.b16 %v53
  %v107 = vunpack.c.l.b16 %v54
  %v108 = vunpack.c.l.b16 %v55
  %v109 = vunpack.c.l.b16 %v56
  %v110 = vunpack.c.l.b16 %v57
  %v111 = vunpack.c.l.b16 %v58
  %v112 = vunpack.c.l.b16 %v59
  %v113 = vunpack.c.l.b16 %v60
  %v114 = vunpack.c.l.b16 %v61
  %v115 = vunpack.c.l.b16 %v62
  %v116 = vunpack.c.l.b16 %v63
  %v117 = vunpack.c.l.b16 %v64
  %v118 = vpack.c.b16 %v103, %v102
  %v119 = vpack.c.b16 %v105, %v104
  %v120 = vpack.c.b16 %v107, %v106
  %v121 = vpack.c.b16 %v109, %v108
  %v122 = vpack.c.b16 %v111, %v110
  %v123 = vpack.c.b16 %v113, %v112
  %v124 = vpack.c.b16 %v115, %v114
  %v125 = vpack.c.b16 %v117, %v116
  %v131 = vunpack.c.l.b16 %v81
  %v132 = vunpack.c.l.b16 %v82
  %v133 = vunpack.c.l.b16 %v83
  %v134 = vunpack.c.l.b16 %v84
  %v135 = vunpack.c.l.b16 %v85
  %v136 = vpack.c.b16 %v132, %v131
  %v137 = vpack.c.b16 %v134, %v133
  %v138 = vpack.c.b16 %v135, %v135
  %vm141 = vcmask 293888
  %v143 = vsel %vm141, %v118, 0
  %v146 = vsel %vm141, %v119, 0
  %v149 = vsel %vm141, %v120, 0
  %v152 = vsel %vm141, %v121, 0
  %v155 = vsel %vm141, %v122, 0
  %v158 = vsel %vm141, %v123, 0
  %v161 = vsel %vm141, %v124, 0
  %v164 = vsel %vm141, %v125, 0
  %vm166 = vcmask 1041408
  %v168 = vsel %vm166, %v138, 0
  %170 = vmatpush.bf16.msra.mxu0 0
  %171 = vmatpush.bf16.msra.mxu0 0
  %172 = vmatpush.bf16.msra.mxu0 0
  %173 = vmatpush.bf16.msra.mxu0 0
  %174 = vmatpush.bf16.msra.mxu0 0
  %175 = vmatpush.bf16.msra.mxu0 %v168
  %176 = vmatpush.bf16.msra.mxu0 %v137
  %177 = vmatpush.bf16.msra.mxu0 %v136
  %178 = vmatmul.bf16.gmra.mxu0 %v143
  %v179 = vpop.f32.mrf.mxu0
  %v180 = vadd.f32 0.0, %v179
  %v181 = vpop.f32.mrf.mxu0
  %v182 = vadd.f32 0.0, %v181
  %183 = vmatmul.bf16.gmra.mxu0 %v146
  %v184 = vpop.f32.mrf.mxu0
  %v185 = vadd.f32 0.0, %v184
  %v186 = vpop.f32.mrf.mxu0
  %v187 = vadd.f32 0.0, %v186
  %188 = vmatmul.bf16.gmra.mxu0 %v149
  %v189 = vpop.f32.mrf.mxu0
  %v190 = vadd.f32 0.0, %v189
  %v191 = vpop.f32.mrf.mxu0
  %v192 = vadd.f32 0.0, %v191
  %193 = vmatmul.bf16.gmra.mxu0 %v152
  %v194 = vpop.f32.mrf.mxu0
  %v195 = vadd.f32 0.0, %v194
  %v196 = vpop.f32.mrf.mxu0
  %v197 = vadd.f32 0.0, %v196
  %198 = vmatmul.bf16.gmra.mxu0 %v155
  %v199 = vpop.f32.mrf.mxu0
  %v200 = vadd.f32 0.0, %v199
  %v201 = vpop.f32.mrf.mxu0
  %v202 = vadd.f32 0.0, %v201
  %203 = vmatmul.bf16.gmra.mxu0 %v158
  %v204 = vpop.f32.mrf.mxu0
  %v205 = vadd.f32 0.0, %v204
  %v206 = vpop.f32.mrf.mxu0
  %v207 = vadd.f32 0.0, %v206
  %208 = vmatmul.bf16.gmra.mxu0 %v161
  %v209 = vpop.f32.mrf.mxu0
  %v210 = vadd.f32 0.0, %v209
  %v211 = vpop.f32.mrf.mxu0
  %v212 = vadd.f32 0.0, %v211
  %213 = vmatmul.bf16.gmra.mxu0 %v164
  %v214 = vpop.f32.mrf.mxu0
  %v215 = vadd.f32 0.0, %v214
  %v216 = vpop.f32.mrf.mxu0
  %v217 = vadd.f32 0.0, %v216
  %218 = vdwg.mxu0
  %v219 = vadd.f32 %v65, %v180
  %v220 = vadd.f32 %v66, %v182
  %v221 = vadd.f32 %v67, %v185
  %v222 = vadd.f32 %v68, %v187
  %v223 = vadd.f32 %v69, %v190
  %v224 = vadd.f32 %v70, %v192
  %v225 = vadd.f32 %v71, %v195
  %v226 = vadd.f32 %v72, %v197
  %v227 = vadd.f32 %v73, %v200
  %v228 = vadd.f32 %v74, %v202
  %v229 = vadd.f32 %v75, %v205
  %v230 = vadd.f32 %v76, %v207
  %v231 = vadd.f32 %v77, %v210
  %v232 = vadd.f32 %v78, %v212
  %v233 = vadd.f32 %v79, %v215
  %v234 = vadd.f32 %v80, %v217
  %235 = vst [vmem:[#allocation2] sm:$0xff] %v219
  %236 = vst [vmem:[#allocation2 + $0x8] sm:$0xff] %v220
  %237 = vst [vmem:[#allocation2 + $0x10] sm:$0xff] %v221
  %238 = vst [vmem:[#allocation2 + $0x18] sm:$0xff] %v222
  %239 = vst [vmem:[#allocation2 + $0x20] sm:$0xff] %v223
  %240 = vst [vmem:[#allocation2 + $0x28] sm:$0xff] %v224
  %241 = vst [vmem:[#allocation2 + $0x30] sm:$0xff] %v225
  %242 = vst [vmem:[#allocation2 + $0x38] sm:$0xff] %v226
  %243 = vst [vmem:[#allocation2 + $0x40] sm:$0xff] %v227
  %244 = vst [vmem:[#allocation2 + $0x48] sm:$0xff] %v228
  %245 = vst [vmem:[#allocation2 + $0x50] sm:$0xff] %v229
  %246 = vst [vmem:[#allocation2 + $0x58] sm:$0xff] %v230
  %247 = vst [vmem:[#allocation2 + $0x60] sm:$0xff] %v231
  %248 = vst [vmem:[#allocation2 + $0x68] sm:$0xff] %v232
  %249 = vst [vmem:[#allocation2 + $0x70] sm:$0xff] %v233
  %250 = vst [vmem:[#allocation2 + $0x78] sm:$0xff] %v234
  %v251 = vunpack.c.l.bf16 %v49
  %v252 = vunpack.c.l.bf16 %v50
  %v253 = vunpack.c.l.bf16 %v51
  %v254 = vunpack.c.l.bf16 %v52
  %v255 = vunpack.c.l.bf16 %v53
  %v256 = vunpack.c.l.bf16 %v54
  %v257 = vunpack.c.l.bf16 %v55
  %v258 = vunpack.c.l.bf16 %v56
  %v259 = vunpack.c.l.bf16 %v57
  %v260 = vunpack.c.l.bf16 %v58
  %v261 = vunpack.c.l.bf16 %v59
  %v262 = vunpack.c.l.bf16 %v60
  %v263 = vunpack.c.l.bf16 %v61
  %v264 = vunpack.c.l.bf16 %v62
  %v265 = vunpack.c.l.bf16 %v63
  %v266 = vunpack.c.l.bf16 %v64
  %v267 = vld [vmem:[#allocation3] sm:$0xff]
  %v268 = vld [vmem:[#allocation3 + $0x8] sm:$0xff]
  %v269 = vld [vmem:[#allocation3 + $0x10] sm:$0xff]
  %v270 = vld [vmem:[#allocation3 + $0x18] sm:$0xff]
  %v271 = vld [vmem:[#allocation3 + $0x20] sm:$0xff]
  %v272 = vld [vmem:[#allocation3 + $0x28] sm:$0xff]
  %v273 = vld [vmem:[#allocation3 + $0x30] sm:$0xff]
  %v274 = vld [vmem:[#allocation3 + $0x38] sm:$0xff]
  %v275 = vld [vmem:[#allocation3 + $0x40] sm:$0xff]
  %v276 = vld [vmem:[#allocation3 + $0x48] sm:$0xff]
  %v277 = vld [vmem:[#allocation3 + $0x50] sm:$0xff]
  %v278 = vld [vmem:[#allocation3 + $0x58] sm:$0xff]
  %v279 = vld [vmem:[#allocation3 + $0x60] sm:$0xff]
  %v280 = vld [vmem:[#allocation3 + $0x68] sm:$0xff]
  %v281 = vld [vmem:[#allocation3 + $0x70] sm:$0xff]
  %v282 = vld [vmem:[#allocation3 + $0x78] sm:$0xff]
  %v283 = vmul.f32 %v251, %v251
  %v284 = vmul.f32 %v252, %v252
  %v285 = vmul.f32 %v253, %v253
  %v286 = vmul.f32 %v254, %v254
  %v287 = vmul.f32 %v255, %v255
  %v288 = vmul.f32 %v256, %v256
  %v289 = vmul.f32 %v257, %v257
  %v290 = vmul.f32 %v258, %v258
  %v291 = vmul.f32 %v259, %v259
  %v292 = vmul.f32 %v260, %v260
  %v293 = vmul.f32 %v261, %v261
  %v294 = vmul.f32 %v262, %v262
  %v295 = vmul.f32 %v263, %v263
  %v296 = vmul.f32 %v264, %v264
  %v297 = vmul.f32 %v265, %v265
  %v298 = vmul.f32 %v266, %v266
  %v299 = vsel %vm141, %v283, 0.0
  %300 = vadd.xlane.f32.xlu0 %v299
  %v301 = vpop.xlane.xlu0 %300
  %v302 = vsel %vm141, %v284, 0.0
  %303 = vadd.xlane.f32.xlu0 %v302
  %v304 = vpop.xlane.xlu0 %303
  %v305 = vsel %vm141, %v285, 0.0
  %306 = vadd.xlane.f32.xlu0 %v305
  %v307 = vpop.xlane.xlu0 %306
  %v308 = vsel %vm141, %v286, 0.0
  %309 = vadd.xlane.f32.xlu0 %v308
  %v310 = vpop.xlane.xlu0 %309
  %v311 = vsel %vm141, %v287, 0.0
  %312 = vadd.xlane.f32.xlu0 %v311
  %v313 = vpop.xlane.xlu0 %312
  %v314 = vsel %vm141, %v288, 0.0
  %315 = vadd.xlane.f32.xlu0 %v314
  %v316 = vpop.xlane.xlu0 %315
  %v317 = vsel %vm141, %v289, 0.0
  %318 = vadd.xlane.f32.xlu0 %v317
  %v319 = vpop.xlane.xlu0 %318
  %v320 = vsel %vm141, %v290, 0.0
  %321 = vadd.xlane.f32.xlu0 %v320
  %v322 = vpop.xlane.xlu0 %321
  %v323 = vsel %vm141, %v291, 0.0
  %324 = vadd.xlane.f32.xlu0 %v323
  %v325 = vpop.xlane.xlu0 %324
  %v326 = vsel %vm141, %v292, 0.0
  %327 = vadd.xlane.f32.xlu0 %v326
  %v328 = vpop.xlane.xlu0 %327
  %v329 = vsel %vm141, %v293, 0.0
  %330 = vadd.xlane.f32.xlu0 %v329
  %v331 = vpop.xlane.xlu0 %330
  %v332 = vsel %vm141, %v294, 0.0
  %333 = vadd.xlane.f32.xlu0 %v332
  %v334 = vpop.xlane.xlu0 %333
  %v335 = vsel %vm141, %v295, 0.0
  %336 = vadd.xlane.f32.xlu0 %v335
  %v337 = vpop.xlane.xlu0 %336
  %v338 = vsel %vm141, %v296, 0.0
  %339 = vadd.xlane.f32.xlu0 %v338
  %v340 = vpop.xlane.xlu0 %339
  %v341 = vsel %vm141, %v297, 0.0
  %342 = vadd.xlane.f32.xlu0 %v341
  %v343 = vpop.xlane.xlu0 %342
  %v344 = vsel %vm141, %v298, 0.0
  %345 = vadd.xlane.f32.xlu0 %v344
  %v346 = vpop.xlane.xlu0 %345
  %v347 = vadd.f32 %v267, %v301
  %v348 = vadd.f32 %v268, %v304
  %v349 = vadd.f32 %v269, %v307
  %v350 = vadd.f32 %v270, %v310
  %v351 = vadd.f32 %v271, %v313
  %v352 = vadd.f32 %v272, %v316
  %v353 = vadd.f32 %v273, %v319
  %v354 = vadd.f32 %v274, %v322
  %v355 = vadd.f32 %v275, %v325
  %v356 = vadd.f32 %v276, %v328
  %v357 = vadd.f32 %v277, %v331
  %v358 = vadd.f32 %v278, %v334
  %v359 = vadd.f32 %v279, %v337
  %v360 = vadd.f32 %v280, %v340
  %v361 = vadd.f32 %v281, %v343
  %v362 = vadd.f32 %v282, %v346
  %vm363 = vcmask 7168
  %364 = vst.msk [vmem:[#allocation3] sm:$0xff] %vm363, %v347
  %365 = vst.msk [vmem:[#allocation3 + $0x8] sm:$0xff] %vm363, %v348
  %366 = vst.msk [vmem:[#allocation3 + $0x10] sm:$0xff] %vm363, %v349
  %367 = vst.msk [vmem:[#allocation3 + $0x18] sm:$0xff] %vm363, %v350
  %368 = vst.msk [vmem:[#allocation3 + $0x20] sm:$0xff] %vm363, %v351
  %369 = vst.msk [vmem:[#allocation3 + $0x28] sm:$0xff] %vm363, %v352
  %370 = vst.msk [vmem:[#allocation3 + $0x30] sm:$0xff] %vm363, %v353
  %371 = vst.msk [vmem:[#allocation3 + $0x38] sm:$0xff] %vm363, %v354
  %372 = vst.msk [vmem:[#allocation3 + $0x40] sm:$0xff] %vm363, %v355
  %373 = vst.msk [vmem:[#allocation3 + $0x48] sm:$0xff] %vm363, %v356
  %374 = vst.msk [vmem:[#allocation3 + $0x50] sm:$0xff] %vm363, %v357
  %375 = vst.msk [vmem:[#allocation3 + $0x58] sm:$0xff] %vm363, %v358
  %376 = vst.msk [vmem:[#allocation3 + $0x60] sm:$0xff] %vm363, %v359
  %377 = vst.msk [vmem:[#allocation3 + $0x68] sm:$0xff] %vm363, %v360
  %378 = vst.msk [vmem:[#allocation3 + $0x70] sm:$0xff] %vm363, %v361
  %379 = vst.msk [vmem:[#allocation3 + $0x78] sm:$0xff] %vm363, %v362
  // Predicated region
  $region14: #{a_call__.4} parent=0 // pred_check
    %p380 = pneg %p12
  $region15: #{a_call__.4} parent=0 // pred_check_branch
    %382 = sbr.rel (%p380) target = $region17
  $region16: #{a_call__.4} parent=0 // pred_region
    %v383 = vld [vmem:[#allocation3] sm:$0xff]
    %v384 = vld [vmem:[#allocation3 + $0x8] sm:$0xff]
    %v385 = vld [vmem:[#allocation3 + $0x10] sm:$0xff]
    %v386 = vld [vmem:[#allocation3 + $0x18] sm:$0xff]
    %v387 = vld [vmem:[#allocation3 + $0x20] sm:$0xff]
    %v388 = vld [vmem:[#allocation3 + $0x28] sm:$0xff]
    %v389 = vld [vmem:[#allocation3 + $0x30] sm:$0xff]
    %v390 = vld [vmem:[#allocation3 + $0x38] sm:$0xff]
    %v391 = vld [vmem:[#allocation3 + $0x40] sm:$0xff]
    %v392 = vld [vmem:[#allocation3 + $0x48] sm:$0xff]
    %v393 = vld [vmem:[#allocation3 + $0x50] sm:$0xff]
    %v394 = vld [vmem:[#allocation3 + $0x58] sm:$0xff]
    %v395 = vld [vmem:[#allocation3 + $0x60] sm:$0xff]
    %v396 = vld [vmem:[#allocation3 + $0x68] sm:$0xff]
    %v397 = vld [vmem:[#allocation3 + $0x70] sm:$0xff]
    %v398 = vld [vmem:[#allocation3 + $0x78] sm:$0xff]
    %v399 = vmax.f32 %v383, 1e-24
    %v400 = vmax.f32 %v384, 1e-24
    %v401 = vmax.f32 %v385, 1e-24
    %v402 = vmax.f32 %v386, 1e-24
    %v403 = vmax.f32 %v387, 1e-24
    %v404 = vmax.f32 %v388, 1e-24
    %v405 = vmax.f32 %v389, 1e-24
    %v406 = vmax.f32 %v390, 1e-24
    %v407 = vmax.f32 %v391, 1e-24
    %v408 = vmax.f32 %v392, 1e-24
    %v409 = vmax.f32 %v393, 1e-24
    %v410 = vmax.f32 %v394, 1e-24
    %v411 = vmax.f32 %v395, 1e-24
    %v412 = vmax.f32 %v396, 1e-24
    %v413 = vmax.f32 %v397, 1e-24
    %v414 = vmax.f32 %v398, 1e-24
    %v415 = vrsqrt.pop %v399
    %v416 = vmul.f32 %v415, %v399
    %v417 = vmul.f32 %v416, %v415
    %v418 = vmul.f32 0.5, %v417
    %v419 = vsub.f32 1.5, %v418
    %v420 = vmul.f32 %v415, %v419
    %vm421 = vweird.f32 %v399
    %vm422 = vweird.f32 %v415
    %vm423 = vmor %vm421, %vm422
    %v424 = vsel %vm423, %v415, %v420
    %v425 = vrsqrt.pop %v400
    %v426 = vmul.f32 %v425, %v400
    %v427 = vmul.f32 %v426, %v425
    %v428 = vmul.f32 0.5, %v427
    %v429 = vsub.f32 1.5, %v428
    %v430 = vmul.f32 %v425, %v429
    %vm431 = vweird.f32 %v400
    %vm432 = vweird.f32 %v425
    %vm433 = vmor %vm431, %vm432
    %v434 = vsel %vm433, %v425, %v430
    %v435 = vrsqrt.pop %v401
    %v436 = vmul.f32 %v435, %v401
    %v437 = vmul.f32 %v436, %v435
    %v438 = vmul.f32 0.5, %v437
    %v439 = vsub.f32 1.5, %v438
    %v440 = vmul.f32 %v435, %v439
    %vm441 = vweird.f32 %v401
    %vm442 = vweird.f32 %v435
    %vm443 = vmor %vm441, %vm442
    %v444 = vsel %vm443, %v435, %v440
    %v445 = vrsqrt.pop %v402
    %v446 = vmul.f32 %v445, %v402
    %v447 = vmul.f32 %v446, %v445
    %v448 = vmul.f32 0.5, %v447
    %v449 = vsub.f32 1.5, %v448
    %v450 = vmul.f32 %v445, %v449
    %vm451 = vweird.f32 %v402
    %vm452 = vweird.f32 %v445
    %vm453 = vmor %vm451, %vm452
    %v454 = vsel %vm453, %v445, %v450
    %v455 = vrsqrt.pop %v403
    %v456 = vmul.f32 %v455, %v403
    %v457 = vmul.f32 %v456, %v455
    %v458 = vmul.f32 0.5, %v457
    %v459 = vsub.f32 1.5, %v458
    %v460 = vmul.f32 %v455, %v459
    %vm461 = vweird.f32 %v403
    %vm462 = vweird.f32 %v455
    %vm463 = vmor %vm461, %vm462
    %v464 = vsel %vm463, %v455, %v460
    %v465 = vrsqrt.pop %v404
    %v466 = vmul.f32 %v465, %v404
    %v467 = vmul.f32 %v466, %v465
    %v468 = vmul.f32 0.5, %v467
    %v469 = vsub.f32 1.5, %v468
    %v470 = vmul.f32 %v465, %v469
    %vm471 = vweird.f32 %v404
    %vm472 = vweird.f32 %v465
    %vm473 = vmor %vm471, %vm472
    %v474 = vsel %vm473, %v465, %v470
    %v475 = vrsqrt.pop %v405
    %v476 = vmul.f32 %v475, %v405
    %v477 = vmul.f32 %v476, %v475
    %v478 = vmul.f32 0.5, %v477
    %v479 = vsub.f32 1.5, %v478
    %v480 = vmul.f32 %v475, %v479
    %vm481 = vweird.f32 %v405
    %vm482 = vweird.f32 %v475
    %vm483 = vmor %vm481, %vm482
    %v484 = vsel %vm483, %v475, %v480
    %v485 = vrsqrt.pop %v406
    %v486 = vmul.f32 %v485, %v406
    %v487 = vmul.f32 %v486, %v485
    %v488 = vmul.f32 0.5, %v487
    %v489 = vsub.f32 1.5, %v488
    %v490 = vmul.f32 %v485, %v489
    %vm491 = vweird.f32 %v406
    %vm492 = vweird.f32 %v485
    %vm493 = vmor %vm491, %vm492
    %v494 = vsel %vm493, %v485, %v490
    %v495 = vrsqrt.pop %v407
    %v496 = vmul.f32 %v495, %v407
    %v497 = vmul.f32 %v496, %v495
    %v498 = vmul.f32 0.5, %v497
    %v499 = vsub.f32 1.5, %v498
    %v500 = vmul.f32 %v495, %v499
    %vm501 = vweird.f32 %v407
    %vm502 = vweird.f32 %v495
    %vm503 = vmor %vm501, %vm502
    %v504 = vsel %vm503, %v495, %v500
    %v505 = vrsqrt.pop %v408
    %v506 = vmul.f32 %v505, %v408
    %v507 = vmul.f32 %v506, %v505
    %v508 = vmul.f32 0.5, %v507
    %v509 = vsub.f32 1.5, %v508
    %v510 = vmul.f32 %v505, %v509
    %vm511 = vweird.f32 %v408
    %vm512 = vweird.f32 %v505
    %vm513 = vmor %vm511, %vm512
    %v514 = vsel %vm513, %v505, %v510
    %v515 = vrsqrt.pop %v409
    %v516 = vmul.f32 %v515, %v409
    %v517 = vmul.f32 %v516, %v515
    %v518 = vmul.f32 0.5, %v517
    %v519 = vsub.f32 1.5, %v518
    %v520 = vmul.f32 %v515, %v519
    %vm521 = vweird.f32 %v409
    %vm522 = vweird.f32 %v515
    %vm523 = vmor %vm521, %vm522
    %v524 = vsel %vm523, %v515, %v520
    %v525 = vrsqrt.pop %v410
    %v526 = vmul.f32 %v525, %v410
    %v527 = vmul.f32 %v526, %v525
    %v528 = vmul.f32 0.5, %v527
    %v529 = vsub.f32 1.5, %v528
    %v530 = vmul.f32 %v525, %v529
    %vm531 = vweird.f32 %v410
    %vm532 = vweird.f32 %v525
    %vm533 = vmor %vm531, %vm532
    %v534 = vsel %vm533, %v525, %v530
    %v535 = vrsqrt.pop %v411
    %v536 = vmul.f32 %v535, %v411
    %v537 = vmul.f32 %v536, %v535
    %v538 = vmul.f32 0.5, %v537
    %v539 = vsub.f32 1.5, %v538
    %v540 = vmul.f32 %v535, %v539
    %vm541 = vweird.f32 %v411
    %vm542 = vweird.f32 %v535
    %vm543 = vmor %vm541, %vm542
    %v544 = vsel %vm543, %v535, %v540
    %v545 = vrsqrt.pop %v412
    %v546 = vmul.f32 %v545, %v412
    %v547 = vmul.f32 %v546, %v545
    %v548 = vmul.f32 0.5, %v547
    %v549 = vsub.f32 1.5, %v548
    %v550 = vmul.f32 %v545, %v549
    %vm551 = vweird.f32 %v412
    %vm552 = vweird.f32 %v545
    %vm553 = vmor %vm551, %vm552
    %v554 = vsel %vm553, %v545, %v550
    %v555 = vrsqrt.pop %v413
    %v556 = vmul.f32 %v555, %v413
    %v557 = vmul.f32 %v556, %v555
    %v558 = vmul.f32 0.5, %v557
    %v559 = vsub.f32 1.5, %v558
    %v560 = vmul.f32 %v555, %v559
    %vm561 = vweird.f32 %v413
    %vm562 = vweird.f32 %v555
    %vm563 = vmor %vm561, %vm562
    %v564 = vsel %vm563, %v555, %v560
    %v565 = vrsqrt.pop %v414
    %v566 = vmul.f32 %v565, %v414
    %v567 = vmul.f32 %v566, %v565
    %v568 = vmul.f32 0.5, %v567
    %v569 = vsub.f32 1.5, %v568
    %v570 = vmul.f32 %v565, %v569
    %vm571 = vweird.f32 %v414
    %vm572 = vweird.f32 %v565
    %vm573 = vmor %vm571, %vm572
    %v574 = vsel %vm573, %v565, %v570
    %v575 = vld [vmem:[#allocation2] sm:$0xff]
    %v576 = vld [vmem:[#allocation2 + $0x8] sm:$0xff]
    %v577 = vld [vmem:[#allocation2 + $0x10] sm:$0xff]
    %v578 = vld [vmem:[#allocation2 + $0x18] sm:$0xff]
    %v579 = vld [vmem:[#allocation2 + $0x20] sm:$0xff]
    %v580 = vld [vmem:[#allocation2 + $0x28] sm:$0xff]
    %v581 = vld [vmem:[#allocation2 + $0x30] sm:$0xff]
    %v582 = vld [vmem:[#allocation2 + $0x38] sm:$0xff]
    %v583 = vld [vmem:[#allocation2 + $0x40] sm:$0xff]
    %v584 = vld [vmem:[#allocation2 + $0x48] sm:$0xff]
    %v585 = vld [vmem:[#allocation2 + $0x50] sm:$0xff]
    %v586 = vld [vmem:[#allocation2 + $0x58] sm:$0xff]
    %v587 = vld [vmem:[#allocation2 + $0x60] sm:$0xff]
    %v588 = vld [vmem:[#allocation2 + $0x68] sm:$0xff]
    %v589 = vld [vmem:[#allocation2 + $0x70] sm:$0xff]
    %v590 = vld [vmem:[#allocation2 + $0x78] sm:$0xff]
    %592 = vset.pattern.permute.xlu0 0
    %593 = vperm.xlu0 %592, %v424
    %v594 = vpop.permute.xlu0 %593
    %597 = vset.pattern.permute.xlu0 0
    %598 = vperm.xlu0 %597, %v434
    %v599 = vpop.permute.xlu0 %598
    %602 = vset.pattern.permute.xlu0 0
    %603 = vperm.xlu0 %602, %v444
    %v604 = vpop.permute.xlu0 %603
    %607 = vset.pattern.permute.xlu0 0
    %608 = vperm.xlu0 %607, %v454
    %v609 = vpop.permute.xlu0 %608
    %612 = vset.pattern.permute.xlu0 0
    %613 = vperm.xlu0 %612, %v464
    %v614 = vpop.permute.xlu0 %613
    %617 = vset.pattern.permute.xlu0 0
    %618 = vperm.xlu0 %617, %v474
    %v619 = vpop.permute.xlu0 %618
    %622 = vset.pattern.permute.xlu0 0
    %623 = vperm.xlu0 %622, %v484
    %v624 = vpop.permute.xlu0 %623
    %627 = vset.pattern.permute.xlu0 0
    %628 = vperm.xlu0 %627, %v494
    %v629 = vpop.permute.xlu0 %628
    %632 = vset.pattern.permute.xlu0 0
    %633 = vperm.xlu0 %632, %v504
    %v634 = vpop.permute.xlu0 %633
    %637 = vset.pattern.permute.xlu0 0
    %638 = vperm.xlu0 %637, %v514
    %v639 = vpop.permute.xlu0 %638
    %642 = vset.pattern.permute.xlu0 0
    %643 = vperm.xlu0 %642, %v524
    %v644 = vpop.permute.xlu0 %643
    %647 = vset.pattern.permute.xlu0 0
    %648 = vperm.xlu0 %647, %v534
    %v649 = vpop.permute.xlu0 %648
    %652 = vset.pattern.permute.xlu0 0
    %653 = vperm.xlu0 %652, %v544
    %v654 = vpop.permute.xlu0 %653
    %657 = vset.pattern.permute.xlu0 0
    %658 = vperm.xlu0 %657, %v554
    %v659 = vpop.permute.xlu0 %658
    %662 = vset.pattern.permute.xlu0 0
    %663 = vperm.xlu0 %662, %v564
    %v664 = vpop.permute.xlu0 %663
    %667 = vset.pattern.permute.xlu0 0
    %668 = vperm.xlu0 %667, %v574
    %v669 = vpop.permute.xlu0 %668
    %v671 = vmul.f32 %v575, %v594
    %v672 = vmul.f32 %v576, %v599
    %v673 = vmul.f32 %v577, %v604
    %v674 = vmul.f32 %v578, %v609
    %v675 = vmul.f32 %v579, %v614
    %v676 = vmul.f32 %v580, %v619
    %v677 = vmul.f32 %v581, %v624
    %v678 = vmul.f32 %v582, %v629
    %v679 = vmul.f32 %v583, %v634
    %v680 = vmul.f32 %v584, %v639
    %v681 = vmul.f32 %v585, %v644
    %v682 = vmul.f32 %v586, %v649
    %v683 = vmul.f32 %v587, %v654
    %v684 = vmul.f32 %v588, %v659
    %v685 = vmul.f32 %v589, %v664
    %v686 = vmul.f32 %v590, %v669
    %v687 = vpack.c.bf16 %v671, %v671
    %v688 = vpack.c.bf16 %v672, %v672
    %v689 = vpack.c.bf16 %v673, %v673
    %v690 = vpack.c.bf16 %v674, %v674
    %v691 = vpack.c.bf16 %v675, %v675
    %v692 = vpack.c.bf16 %v676, %v676
    %v693 = vpack.c.bf16 %v677, %v677
    %v694 = vpack.c.bf16 %v678, %v678
    %v695 = vpack.c.bf16 %v679, %v679
    %v696 = vpack.c.bf16 %v680, %v680
    %v697 = vpack.c.bf16 %v681, %v681
    %v698 = vpack.c.bf16 %v682, %v682
    %v699 = vpack.c.bf16 %v683, %v683
    %v700 = vpack.c.bf16 %v684, %v684
    %v701 = vpack.c.bf16 %v685, %v685
    %v702 = vpack.c.bf16 %v686, %v686
    %703 = vst [vmem:[%s2] sm:$0xf] %v687
    %704 = vst [vmem:[%s2 + $0x4] sm:$0xf] %v688
    %705 = vst [vmem:[%s2 + $0x8] sm:$0xf] %v689
    %706 = vst [vmem:[%s2 + $0xc] sm:$0xf] %v690
    %707 = vst [vmem:[%s2 + $0x10] sm:$0xf] %v691
    %708 = vst [vmem:[%s2 + $0x14] sm:$0xf] %v692
    %709 = vst [vmem:[%s2 + $0x18] sm:$0xf] %v693
    %710 = vst [vmem:[%s2 + $0x1c] sm:$0xf] %v694
    %711 = vst [vmem:[%s2 + $0x20] sm:$0xf] %v695
    %712 = vst [vmem:[%s2 + $0x24] sm:$0xf] %v696
    %713 = vst [vmem:[%s2 + $0x28] sm:$0xf] %v697
    %714 = vst [vmem:[%s2 + $0x2c] sm:$0xf] %v698
    %715 = vst [vmem:[%s2 + $0x30] sm:$0xf] %v699
    %716 = vst [vmem:[%s2 + $0x34] sm:$0xf] %v700
    %717 = vst [vmem:[%s2 + $0x38] sm:$0xf] %v701
    %718 = vst [vmem:[%s2 + $0x3c] sm:$0xf] %v702
  $region17: #{a_call__.4} parent=0 // pred_fallthru
    _
  // Predicated region
  $region18: #{a_call__.4} parent=0 // pred_check
    _
  $region19: #{a_call__.4} parent=0 // pred_check_branch
    %720 = sbr.rel (0) target = $region21
  $region20: #{a_call__.4} parent=0 // pred_region
    _
  $region21: #{a_call__.4} parent=0 // pred_fallthru
    _
  // Predicated region
  $region22: #{a_call__.4} parent=0 // pred_check
    _
  $region23: #{a_call__.4} parent=0 // pred_check_branch
    %722 = sbr.rel (0) target = $region25
  $region24: #{a_call__.4} parent=0 // pred_region
    _
  $region25: #{a_call__.4} parent=0 // pred_fallthru
    _

// kernel: a_call__.3
$region0: #{a_call__.3}
  #allocation0 [shape = 'u32[]', space=smem, size = 0x4, offset = 0x4, fixed_abs, tag = 'smem constant byte address 0x4 - core index']
  #allocation1 [shape = 'u32[72,128]{1,0:T(1,128)}', space=vmem, size = 0x9000, scoped, tag = 'internal scratch']
  #allocation2 [shape = 'f32[128,128]{1,0:T(8,128)}', space=vmem, size = 0x10000, scoped, tag = 'scratch operand']
  #allocation3 [shape = 'f32[128,1]{1,0:T(8,128)}', space=vmem, size = 0x10000, scoped, tag = 'scratch operand']
  %s0 = inlined_call_operand.vmem [shape: bf16[128,16], index: 0, kind: input, shape index: {}]
  %s1 = inlined_call_operand.vmem [shape: bf16[16,128], index: 1, kind: input, shape index: {}]
  %s2 = inlined_call_operand.vmem [shape: bf16[128,128], index: 2, kind: output, shape index: {}]
  %s3 = sld [smem:[#allocation0]]
  $region26: #{a_call__.3} parent=0
    _
  %s5 = ssub.s32 1, %s3
  %s6 = scalar_select 0, %s5, %s3
  // Predicated region
  $region2: #{a_call__.3} parent=0 // pred_check
    _
  $region3: #{a_call__.3} parent=0 // pred_check_branch
    %8 = sbr.rel (0) target = $region5
  $region4: #{a_call__.3} parent=0 // pred_region
    _
  $region5: #{a_call__.3} parent=0 // pred_fallthru
    _
  // Predicated region
  $region6: #{a_call__.3} parent=0 // pred_check
    _
  $region7: #{a_call__.3} parent=0 // pred_check_branch
    %10 = sbr.rel (0) target = $region9
  $region8: #{a_call__.3} parent=0 // pred_region
    _
  $region9: #{a_call__.3} parent=0 // pred_fallthru
    _
  %p12 = scmp.eq.s32.totalorder 0, 0
  // Predicated region
  $region10: #{a_call__.3} parent=0 // pred_check
    %p13 = pneg %p12
  $region11: #{a_call__.3} parent=0 // pred_check_branch
    %15 = sbr.rel (%p13) target = $region13
  $region12: #{a_call__.3} parent=0 // pred_region
    %16 = vst [vmem:[#allocation2] sm:$0xff] 0.0
    %17 = vst [vmem:[#allocation2 + $0x8] sm:$0xff] 0.0
    %18 = vst [vmem:[#allocation2 + $0x10] sm:$0xff] 0.0
    %19 = vst [vmem:[#allocation2 + $0x18] sm:$0xff] 0.0
    %20 = vst [vmem:[#allocation2 + $0x20] sm:$0xff] 0.0
    %21 = vst [vmem:[#allocation2 + $0x28] sm:$0xff] 0.0
    %22 = vst [vmem:[#allocation2 + $0x30] sm:$0xff] 0.0
    %23 = vst [vmem:[#allocation2 + $0x38] sm:$0xff] 0.0
    %24 = vst [vmem:[#allocation2 + $0x40] sm:$0xff] 0.0
    %25 = vst [vmem:[#allocation2 + $0x48] sm:$0xff] 0.0
    %26 = vst [vmem:[#allocation2 + $0x50] sm:$0xff] 0.0
    %27 = vst [vmem:[#allocation2 + $0x58] sm:$0xff] 0.0
    %28 = vst [vmem:[#allocation2 + $0x60] sm:$0xff] 0.0
    %29 = vst [vmem:[#allocation2 + $0x68] sm:$0xff] 0.0
    %30 = vst [vmem:[#allocation2 + $0x70] sm:$0xff] 0.0
    %31 = vst [vmem:[#allocation2 + $0x78] sm:$0xff] 0.0
    %vm32 = vcmask 7168
    %33 = vst.msk [vmem:[#allocation3] sm:$0xff] %vm32, 0.0
    %34 = vst.msk [vmem:[#allocation3 + $0x8] sm:$0xff] %vm32, 0.0
    %35 = vst.msk [vmem:[#allocation3 + $0x10] sm:$0xff] %vm32, 0.0
    %36 = vst.msk [vmem:[#allocation3 + $0x18] sm:$0xff] %vm32, 0.0
    %37 = vst.msk [vmem:[#allocation3 + $0x20] sm:$0xff] %vm32, 0.0
    %38 = vst.msk [vmem:[#allocation3 + $0x28] sm:$0xff] %vm32, 0.0
    %39 = vst.msk [vmem:[#allocation3 + $0x30] sm:$0xff] %vm32, 0.0
    %40 = vst.msk [vmem:[#allocation3 + $0x38] sm:$0xff] %vm32, 0.0
    %41 = vst.msk [vmem:[#allocation3 + $0x40] sm:$0xff] %vm32, 0.0
    %42 = vst.msk [vmem:[#allocation3 + $0x48] sm:$0xff] %vm32, 0.0
    %43 = vst.msk [vmem:[#allocation3 + $0x50] sm:$0xff] %vm32, 0.0
    %44 = vst.msk [vmem:[#allocation3 + $0x58] sm:$0xff] %vm32, 0.0
    %45 = vst.msk [vmem:[#allocation3 + $0x60] sm:$0xff] %vm32, 0.0
    %46 = vst.msk [vmem:[#allocation3 + $0x68] sm:$0xff] %vm32, 0.0
    %47 = vst.msk [vmem:[#allocation3 + $0x70] sm:$0xff] %vm32, 0.0
    %48 = vst.msk [vmem:[#allocation3 + $0x78] sm:$0xff] %vm32, 0.0
  $region13: #{a_call__.3} parent=0 // pred_fallthru
    _
  %v49 = vld [vmem:[%s0] sm:$0xf]
  %v50 = vld [vmem:[%s0 + $0x4] sm:$0xf]
  %v51 = vld [vmem:[%s0 + $0x8] sm:$0xf]
  %v52 = vld [vmem:[%s0 + $0xc] sm:$0xf]
  %v53 = vld [vmem:[%s0 + $0x10] sm:$0xf]
  %v54 = vld [vmem:[%s0 + $0x14] sm:$0xf]
  %v55 = vld [vmem:[%s0 + $0x18] sm:$0xf]
  %v56 = vld [vmem:[%s0 + $0x1c] sm:$0xf]
  %v57 = vld [vmem:[%s0 + $0x20] sm:$0xf]
  %v58 = vld [vmem:[%s0 + $0x24] sm:$0xf]
  %v59 = vld [vmem:[%s0 + $0x28] sm:$0xf]
  %v60 = vld [vmem:[%s0 + $0x2c] sm:$0xf]
  %v61 = vld [vmem:[%s0 + $0x30] sm:$0xf]
  %v62 = vld [vmem:[%s0 + $0x34] sm:$0xf]
  %v63 = vld [vmem:[%s0 + $0x38] sm:$0xf]
  %v64 = vld [vmem:[%s0 + $0x3c] sm:$0xf]
  %v65 = vld [vmem:[#allocation2] sm:$0xff]
  %v66 = vld [vmem:[#allocation2 + $0x8] sm:$0xff]
  %v67 = vld [vmem:[#allocation2 + $0x10] sm:$0xff]
  %v68 = vld [vmem:[#allocation2 + $0x18] sm:$0xff]
  %v69 = vld [vmem:[#allocation2 + $0x20] sm:$0xff]
  %v70 = vld [vmem:[#allocation2 + $0x28] sm:$0xff]
  %v71 = vld [vmem:[#allocation2 + $0x30] sm:$0xff]
  %v72 = vld [vmem:[#allocation2 + $0x38] sm:$0xff]
  %v73 = vld [vmem:[#allocation2 + $0x40] sm:$0xff]
  %v74 = vld [vmem:[#allocation2 + $0x48] sm:$0xff]
  %v75 = vld [vmem:[#allocation2 + $0x50] sm:$0xff]
  %v76 = vld [vmem:[#allocation2 + $0x58] sm:$0xff]
  %v77 = vld [vmem:[#allocation2 + $0x60] sm:$0xff]
  %v78 = vld [vmem:[#allocation2 + $0x68] sm:$0xff]
  %v79 = vld [vmem:[#allocation2 + $0x70] sm:$0xff]
  %v80 = vld [vmem:[#allocation2 + $0x78] sm:$0xff]
  %v81 = vld [vmem:[%s1] sm:$0xf]
  %v82 = vld [vmem:[%s1 + $0x4] sm:$0xf]
  %v99 = vunpack.c.l.b16 %v49
  %v100 = vunpack.c.l.b16 %v50
  %v101 = vunpack.c.l.b16 %v51
  %v102 = vunpack.c.l.b16 %v52
  %v103 = vunpack.c.l.b16 %v53
  %v104 = vunpack.c.l.b16 %v54
  %v105 = vunpack.c.l.b16 %v55
  %v106 = vunpack.c.l.b16 %v56
  %v107 = vunpack.c.l.b16 %v57
  %v108 = vunpack.c.l.b16 %v58
  %v109 = vunpack.c.l.b16 %v59
  %v110 = vunpack.c.l.b16 %v60
  %v111 = vunpack.c.l.b16 %v61
  %v112 = vunpack.c.l.b16 %v62
  %v113 = vunpack.c.l.b16 %v63
  %v114 = vunpack.c.l.b16 %v64
  %v115 = vpack.c.b16 %v100, %v99
  %v116 = vpack.c.b16 %v102, %v101
  %v117 = vpack.c.b16 %v104, %v103
  %v118 = vpack.c.b16 %v106, %v105
  %v119 = vpack.c.b16 %v108, %v107
  %v120 = vpack.c.b16 %v110, %v109
  %v121 = vpack.c.b16 %v112, %v111
  %v122 = vpack.c.b16 %v114, %v113
  %v125 = vunpack.c.l.b16 %v81
  %v126 = vunpack.c.l.b16 %v82
  %v127 = vpack.c.b16 %v126, %v125
  %vm129 = vcmask 130048
  %v131 = vsel %vm129, %v115, 0
  %v134 = vsel %vm129, %v116, 0
  %v137 = vsel %vm129, %v117, 0
  %v140 = vsel %vm129, %v118, 0
  %v143 = vsel %vm129, %v119, 0
  %v146 = vsel %vm129, %v120, 0
  %v149 = vsel %vm129, %v121, 0
  %v152 = vsel %vm129, %v122, 0
  %154 = vmatpush.bf16.msra.mxu0 0
  %155 = vmatpush.bf16.msra.mxu0 0
  %156 = vmatpush.bf16.msra.mxu0 0
  %157 = vmatpush.bf16.msra.mxu0 0
  %158 = vmatpush.bf16.msra.mxu0 0
  %159 = vmatpush.bf16.msra.mxu0 0
  %160 = vmatpush.bf16.msra.mxu0 0
  %161 = vmatpush.bf16.msra.mxu0 %v127
  %162 = vmatmul.bf16.gmra.mxu0 %v131
  %v163 = vpop.f32.mrf.mxu0
  %v164 = vadd.f32 0.0, %v163
  %v165 = vpop.f32.mrf.mxu0
  %v166 = vadd.f32 0.0, %v165
  %167 = vmatmul.bf16.gmra.mxu0 %v134
  %v168 = vpop.f32.mrf.mxu0
  %v169 = vadd.f32 0.0, %v168
  %v170 = vpop.f32.mrf.mxu0
  %v171 = vadd.f32 0.0, %v170
  %172 = vmatmul.bf16.gmra.mxu0 %v137
  %v173 = vpop.f32.mrf.mxu0
  %v174 = vadd.f32 0.0, %v173
  %v175 = vpop.f32.mrf.mxu0
  %v176 = vadd.f32 0.0, %v175
  %177 = vmatmul.bf16.gmra.mxu0 %v140
  %v178 = vpop.f32.mrf.mxu0
  %v179 = vadd.f32 0.0, %v178
  %v180 = vpop.f32.mrf.mxu0
  %v181 = vadd.f32 0.0, %v180
  %182 = vmatmul.bf16.gmra.mxu0 %v143
  %v183 = vpop.f32.mrf.mxu0
  %v184 = vadd.f32 0.0, %v183
  %v185 = vpop.f32.mrf.mxu0
  %v186 = vadd.f32 0.0, %v185
  %187 = vmatmul.bf16.gmra.mxu0 %v146
  %v188 = vpop.f32.mrf.mxu0
  %v189 = vadd.f32 0.0, %v188
  %v190 = vpop.f32.mrf.mxu0
  %v191 = vadd.f32 0.0, %v190
  %192 = vmatmul.bf16.gmra.mxu0 %v149
  %v193 = vpop.f32.mrf.mxu0
  %v194 = vadd.f32 0.0, %v193
  %v195 = vpop.f32.mrf.mxu0
  %v196 = vadd.f32 0.0, %v195
  %197 = vmatmul.bf16.gmra.mxu0 %v152
  %v198 = vpop.f32.mrf.mxu0
  %v199 = vadd.f32 0.0, %v198
  %v200 = vpop.f32.mrf.mxu0
  %v201 = vadd.f32 0.0, %v200
  %202 = vdwg.mxu0
  %v203 = vadd.f32 %v65, %v164
  %v204 = vadd.f32 %v66, %v166
  %v205 = vadd.f32 %v67, %v169
  %v206 = vadd.f32 %v68, %v171
  %v207 = vadd.f32 %v69, %v174
  %v208 = vadd.f32 %v70, %v176
  %v209 = vadd.f32 %v71, %v179
  %v210 = vadd.f32 %v72, %v181
  %v211 = vadd.f32 %v73, %v184
  %v212 = vadd.f32 %v74, %v186
  %v213 = vadd.f32 %v75, %v189
  %v214 = vadd.f32 %v76, %v191
  %v215 = vadd.f32 %v77, %v194
  %v216 = vadd.f32 %v78, %v196
  %v217 = vadd.f32 %v79, %v199
  %v218 = vadd.f32 %v80, %v201
  %219 = vst [vmem:[#allocation2] sm:$0xff] %v203
  %220 = vst [vmem:[#allocation2 + $0x8] sm:$0xff] %v204
  %221 = vst [vmem:[#allocation2 + $0x10] sm:$0xff] %v205
  %222 = vst [vmem:[#allocation2 + $0x18] sm:$0xff] %v206
  %223 = vst [vmem:[#allocation2 + $0x20] sm:$0xff] %v207
  %224 = vst [vmem:[#allocation2 + $0x28] sm:$0xff] %v208
  %225 = vst [vmem:[#allocation2 + $0x30] sm:$0xff] %v209
  %226 = vst [vmem:[#allocation2 + $0x38] sm:$0xff] %v210
  %227 = vst [vmem:[#allocation2 + $0x40] sm:$0xff] %v211
  %228 = vst [vmem:[#allocation2 + $0x48] sm:$0xff] %v212
  %229 = vst [vmem:[#allocation2 + $0x50] sm:$0xff] %v213
  %230 = vst [vmem:[#allocation2 + $0x58] sm:$0xff] %v214
  %231 = vst [vmem:[#allocation2 + $0x60] sm:$0xff] %v215
  %232 = vst [vmem:[#allocation2 + $0x68] sm:$0xff] %v216
  %233 = vst [vmem:[#allocation2 + $0x70] sm:$0xff] %v217
  %234 = vst [vmem:[#allocation2 + $0x78] sm:$0xff] %v218
  %v235 = vunpack.c.l.bf16 %v49
  %v236 = vunpack.c.l.bf16 %v50
  %v237 = vunpack.c.l.bf16 %v51
  %v238 = vunpack.c.l.bf16 %v52
  %v239 = vunpack.c.l.bf16 %v53
  %v240 = vunpack.c.l.bf16 %v54
  %v241 = vunpack.c.l.bf16 %v55
  %v242 = vunpack.c.l.bf16 %v56
  %v243 = vunpack.c.l.bf16 %v57
  %v244 = vunpack.c.l.bf16 %v58
  %v245 = vunpack.c.l.bf16 %v59
  %v246 = vunpack.c.l.bf16 %v60
  %v247 = vunpack.c.l.bf16 %v61
  %v248 = vunpack.c.l.bf16 %v62
  %v249 = vunpack.c.l.bf16 %v63
  %v250 = vunpack.c.l.bf16 %v64
  %v251 = vld [vmem:[#allocation3] sm:$0xff]
  %v252 = vld [vmem:[#allocation3 + $0x8] sm:$0xff]
  %v253 = vld [vmem:[#allocation3 + $0x10] sm:$0xff]
  %v254 = vld [vmem:[#allocation3 + $0x18] sm:$0xff]
  %v255 = vld [vmem:[#allocation3 + $0x20] sm:$0xff]
  %v256 = vld [vmem:[#allocation3 + $0x28] sm:$0xff]
  %v257 = vld [vmem:[#allocation3 + $0x30] sm:$0xff]
  %v258 = vld [vmem:[#allocation3 + $0x38] sm:$0xff]
  %v259 = vld [vmem:[#allocation3 + $0x40] sm:$0xff]
  %v260 = vld [vmem:[#allocation3 + $0x48] sm:$0xff]
  %v261 = vld [vmem:[#allocation3 + $0x50] sm:$0xff]
  %v262 = vld [vmem:[#allocation3 + $0x58] sm:$0xff]
  %v263 = vld [vmem:[#allocation3 + $0x60] sm:$0xff]
  %v264 = vld [vmem:[#allocation3 + $0x68] sm:$0xff]
  %v265 = vld [vmem:[#allocation3 + $0x70] sm:$0xff]
  %v266 = vld [vmem:[#allocation3 + $0x78] sm:$0xff]
  %v267 = vmul.f32 %v235, %v235
  %v268 = vmul.f32 %v236, %v236
  %v269 = vmul.f32 %v237, %v237
  %v270 = vmul.f32 %v238, %v238
  %v271 = vmul.f32 %v239, %v239
  %v272 = vmul.f32 %v240, %v240
  %v273 = vmul.f32 %v241, %v241
  %v274 = vmul.f32 %v242, %v242
  %v275 = vmul.f32 %v243, %v243
  %v276 = vmul.f32 %v244, %v244
  %v277 = vmul.f32 %v245, %v245
  %v278 = vmul.f32 %v246, %v246
  %v279 = vmul.f32 %v247, %v247
  %v280 = vmul.f32 %v248, %v248
  %v281 = vmul.f32 %v249, %v249
  %v282 = vmul.f32 %v250, %v250
  %v283 = vsel %vm129, %v267, 0.0
  %284 = vadd.xlane.f32.xlu0 %v283
  %v285 = vpop.xlane.xlu0 %284
  %v286 = vsel %vm129, %v268, 0.0
  %287 = vadd.xlane.f32.xlu0 %v286
  %v288 = vpop.xlane.xlu0 %287
  %v289 = vsel %vm129, %v269, 0.0
  %290 = vadd.xlane.f32.xlu0 %v289
  %v291 = vpop.xlane.xlu0 %290
  %v292 = vsel %vm129, %v270, 0.0
  %293 = vadd.xlane.f32.xlu0 %v292
  %v294 = vpop.xlane.xlu0 %293
  %v295 = vsel %vm129, %v271, 0.0
  %296 = vadd.xlane.f32.xlu0 %v295
  %v297 = vpop.xlane.xlu0 %296
  %v298 = vsel %vm129, %v272, 0.0
  %299 = vadd.xlane.f32.xlu0 %v298
  %v300 = vpop.xlane.xlu0 %299
  %v301 = vsel %vm129, %v273, 0.0
  %302 = vadd.xlane.f32.xlu0 %v301
  %v303 = vpop.xlane.xlu0 %302
  %v304 = vsel %vm129, %v274, 0.0
  %305 = vadd.xlane.f32.xlu0 %v304
  %v306 = vpop.xlane.xlu0 %305
  %v307 = vsel %vm129, %v275, 0.0
  %308 = vadd.xlane.f32.xlu0 %v307
  %v309 = vpop.xlane.xlu0 %308
  %v310 = vsel %vm129, %v276, 0.0
  %311 = vadd.xlane.f32.xlu0 %v310
  %v312 = vpop.xlane.xlu0 %311
  %v313 = vsel %vm129, %v277, 0.0
  %314 = vadd.xlane.f32.xlu0 %v313
  %v315 = vpop.xlane.xlu0 %314
  %v316 = vsel %vm129, %v278, 0.0
  %317 = vadd.xlane.f32.xlu0 %v316
  %v318 = vpop.xlane.xlu0 %317
  %v319 = vsel %vm129, %v279, 0.0
  %320 = vadd.xlane.f32.xlu0 %v319
  %v321 = vpop.xlane.xlu0 %320
  %v322 = vsel %vm129, %v280, 0.0
  %323 = vadd.xlane.f32.xlu0 %v322
  %v324 = vpop.xlane.xlu0 %323
  %v325 = vsel %vm129, %v281, 0.0
  %326 = vadd.xlane.f32.xlu0 %v325
  %v327 = vpop.xlane.xlu0 %326
  %v328 = vsel %vm129, %v282, 0.0
  %329 = vadd.xlane.f32.xlu0 %v328
  %v330 = vpop.xlane.xlu0 %329
  %v331 = vadd.f32 %v251, %v285
  %v332 = vadd.f32 %v252, %v288
  %v333 = vadd.f32 %v253, %v291
  %v334 = vadd.f32 %v254, %v294
  %v335 = vadd.f32 %v255, %v297
  %v336 = vadd.f32 %v256, %v300
  %v337 = vadd.f32 %v257, %v303
  %v338 = vadd.f32 %v258, %v306
  %v339 = vadd.f32 %v259, %v309
  %v340 = vadd.f32 %v260, %v312
  %v341 = vadd.f32 %v261, %v315
  %v342 = vadd.f32 %v262, %v318
  %v343 = vadd.f32 %v263, %v321
  %v344 = vadd.f32 %v264, %v324
  %v345 = vadd.f32 %v265, %v327
  %v346 = vadd.f32 %v266, %v330
  %vm347 = vcmask 7168
  %348 = vst.msk [vmem:[#allocation3] sm:$0xff] %vm347, %v331
  %349 = vst.msk [vmem:[#allocation3 + $0x8] sm:$0xff] %vm347, %v332
  %350 = vst.msk [vmem:[#allocation3 + $0x10] sm:$0xff] %vm347, %v333
  %351 = vst.msk [vmem:[#allocation3 + $0x18] sm:$0xff] %vm347, %v334
  %352 = vst.msk [vmem:[#allocation3 + $0x20] sm:$0xff] %vm347, %v335
  %353 = vst.msk [vmem:[#allocation3 + $0x28] sm:$0xff] %vm347, %v336
  %354 = vst.msk [vmem:[#allocation3 + $0x30] sm:$0xff] %vm347, %v337
  %355 = vst.msk [vmem:[#allocation3 + $0x38] sm:$0xff] %vm347, %v338
  %356 = vst.msk [vmem:[#allocation3 + $0x40] sm:$0xff] %vm347, %v339
  %357 = vst.msk [vmem:[#allocation3 + $0x48] sm:$0xff] %vm347, %v340
  %358 = vst.msk [vmem:[#allocation3 + $0x50] sm:$0xff] %vm347, %v341
  %359 = vst.msk [vmem:[#allocation3 + $0x58] sm:$0xff] %vm347, %v342
  %360 = vst.msk [vmem:[#allocation3 + $0x60] sm:$0xff] %vm347, %v343
  %361 = vst.msk [vmem:[#allocation3 + $0x68] sm:$0xff] %vm347, %v344
  %362 = vst.msk [vmem:[#allocation3 + $0x70] sm:$0xff] %vm347, %v345
  %363 = vst.msk [vmem:[#allocation3 + $0x78] sm:$0xff] %vm347, %v346
  // Predicated region
  $region14: #{a_call__.3} parent=0 // pred_check
    %p364 = pneg %p12
  $region15: #{a_call__.3} parent=0 // pred_check_branch
    %366 = sbr.rel (%p364) target = $region17
  $region16: #{a_call__.3} parent=0 // pred_region
    %v367 = vld [vmem:[#allocation3] sm:$0xff]
    %v368 = vld [vmem:[#allocation3 + $0x8] sm:$0xff]
    %v369 = vld [vmem:[#allocation3 + $0x10] sm:$0xff]
    %v370 = vld [vmem:[#allocation3 + $0x18] sm:$0xff]
    %v371 = vld [vmem:[#allocation3 + $0x20] sm:$0xff]
    %v372 = vld [vmem:[#allocation3 + $0x28] sm:$0xff]
    %v373 = vld [vmem:[#allocation3 + $0x30] sm:$0xff]
    %v374 = vld [vmem:[#allocation3 + $0x38] sm:$0xff]
    %v375 = vld [vmem:[#allocation3 + $0x40] sm:$0xff]
    %v376 = vld [vmem:[#allocation3 + $0x48] sm:$0xff]
    %v377 = vld [vmem:[#allocation3 + $0x50] sm:$0xff]
    %v378 = vld [vmem:[#allocation3 + $0x58] sm:$0xff]
    %v379 = vld [vmem:[#allocation3 + $0x60] sm:$0xff]
    %v380 = vld [vmem:[#allocation3 + $0x68] sm:$0xff]
    %v381 = vld [vmem:[#allocation3 + $0x70] sm:$0xff]
    %v382 = vld [vmem:[#allocation3 + $0x78] sm:$0xff]
    %v383 = vmax.f32 %v367, 1e-24
    %v384 = vmax.f32 %v368, 1e-24
    %v385 = vmax.f32 %v369, 1e-24
    %v386 = vmax.f32 %v370, 1e-24
    %v387 = vmax.f32 %v371, 1e-24
    %v388 = vmax.f32 %v372, 1e-24
    %v389 = vmax.f32 %v373, 1e-24
    %v390 = vmax.f32 %v374, 1e-24
    %v391 = vmax.f32 %v375, 1e-24
    %v392 = vmax.f32 %v376, 1e-24
    %v393 = vmax.f32 %v377, 1e-24
    %v394 = vmax.f32 %v378, 1e-24
    %v395 = vmax.f32 %v379, 1e-24
    %v396 = vmax.f32 %v380, 1e-24
    %v397 = vmax.f32 %v381, 1e-24
    %v398 = vmax.f32 %v382, 1e-24
    %v399 = vrsqrt.pop %v383
    %v400 = vmul.f32 %v399, %v383
    %v401 = vmul.f32 %v400, %v399
    %v402 = vmul.f32 0.5, %v401
    %v403 = vsub.f32 1.5, %v402
    %v404 = vmul.f32 %v399, %v403
    %vm405 = vweird.f32 %v383
    %vm406 = vweird.f32 %v399
    %vm407 = vmor %vm405, %vm406
    %v408 = vsel %vm407, %v399, %v404
    %v409 = vrsqrt.pop %v384
    %v410 = vmul.f32 %v409, %v384
    %v411 = vmul.f32 %v410, %v409
    %v412 = vmul.f32 0.5, %v411
    %v413 = vsub.f32 1.5, %v412
    %v414 = vmul.f32 %v409, %v413
    %vm415 = vweird.f32 %v384
    %vm416 = vweird.f32 %v409
    %vm417 = vmor %vm415, %vm416
    %v418 = vsel %vm417, %v409, %v414
    %v419 = vrsqrt.pop %v385
    %v420 = vmul.f32 %v419, %v385
    %v421 = vmul.f32 %v420, %v419
    %v422 = vmul.f32 0.5, %v421
    %v423 = vsub.f32 1.5, %v422
    %v424 = vmul.f32 %v419, %v423
    %vm425 = vweird.f32 %v385
    %vm426 = vweird.f32 %v419
    %vm427 = vmor %vm425, %vm426
    %v428 = vsel %vm427, %v419, %v424
    %v429 = vrsqrt.pop %v386
    %v430 = vmul.f32 %v429, %v386
    %v431 = vmul.f32 %v430, %v429
    %v432 = vmul.f32 0.5, %v431
    %v433 = vsub.f32 1.5, %v432
    %v434 = vmul.f32 %v429, %v433
    %vm435 = vweird.f32 %v386
    %vm436 = vweird.f32 %v429
    %vm437 = vmor %vm435, %vm436
    %v438 = vsel %vm437, %v429, %v434
    %v439 = vrsqrt.pop %v387
    %v440 = vmul.f32 %v439, %v387
    %v441 = vmul.f32 %v440, %v439
    %v442 = vmul.f32 0.5, %v441
    %v443 = vsub.f32 1.5, %v442
    %v444 = vmul.f32 %v439, %v443
    %vm445 = vweird.f32 %v387
    %vm446 = vweird.f32 %v439
    %vm447 = vmor %vm445, %vm446
    %v448 = vsel %vm447, %v439, %v444
    %v449 = vrsqrt.pop %v388
    %v450 = vmul.f32 %v449, %v388
    %v451 = vmul.f32 %v450, %v449
    %v452 = vmul.f32 0.5, %v451
    %v453 = vsub.f32 1.5, %v452
    %v454 = vmul.f32 %v449, %v453
    %vm455 = vweird.f32 %v388
    %vm456 = vweird.f32 %v449
    %vm457 = vmor %vm455, %vm456
    %v458 = vsel %vm457, %v449, %v454
    %v459 = vrsqrt.pop %v389
    %v460 = vmul.f32 %v459, %v389
    %v461 = vmul.f32 %v460, %v459
    %v462 = vmul.f32 0.5, %v461
    %v463 = vsub.f32 1.5, %v462
    %v464 = vmul.f32 %v459, %v463
    %vm465 = vweird.f32 %v389
    %vm466 = vweird.f32 %v459
    %vm467 = vmor %vm465, %vm466
    %v468 = vsel %vm467, %v459, %v464
    %v469 = vrsqrt.pop %v390
    %v470 = vmul.f32 %v469, %v390
    %v471 = vmul.f32 %v470, %v469
    %v472 = vmul.f32 0.5, %v471
    %v473 = vsub.f32 1.5, %v472
    %v474 = vmul.f32 %v469, %v473
    %vm475 = vweird.f32 %v390
    %vm476 = vweird.f32 %v469
    %vm477 = vmor %vm475, %vm476
    %v478 = vsel %vm477, %v469, %v474
    %v479 = vrsqrt.pop %v391
    %v480 = vmul.f32 %v479, %v391
    %v481 = vmul.f32 %v480, %v479
    %v482 = vmul.f32 0.5, %v481
    %v483 = vsub.f32 1.5, %v482
    %v484 = vmul.f32 %v479, %v483
    %vm485 = vweird.f32 %v391
    %vm486 = vweird.f32 %v479
    %vm487 = vmor %vm485, %vm486
    %v488 = vsel %vm487, %v479, %v484
    %v489 = vrsqrt.pop %v392
    %v490 = vmul.f32 %v489, %v392
    %v491 = vmul.f32 %v490, %v489
    %v492 = vmul.f32 0.5, %v491
    %v493 = vsub.f32 1.5, %v492
    %v494 = vmul.f32 %v489, %v493
    %vm495 = vweird.f32 %v392
    %vm496 = vweird.f32 %v489
    %vm497 = vmor %vm495, %vm496
    %v498 = vsel %vm497, %v489, %v494
    %v499 = vrsqrt.pop %v393
    %v500 = vmul.f32 %v499, %v393
    %v501 = vmul.f32 %v500, %v499
    %v502 = vmul.f32 0.5, %v501
    %v503 = vsub.f32 1.5, %v502
    %v504 = vmul.f32 %v499, %v503
    %vm505 = vweird.f32 %v393
    %vm506 = vweird.f32 %v499
    %vm507 = vmor %vm505, %vm506
    %v508 = vsel %vm507, %v499, %v504
    %v509 = vrsqrt.pop %v394
    %v510 = vmul.f32 %v509, %v394
    %v511 = vmul.f32 %v510, %v509
    %v512 = vmul.f32 0.5, %v511
    %v513 = vsub.f32 1.5, %v512
    %v514 = vmul.f32 %v509, %v513
    %vm515 = vweird.f32 %v394
    %vm516 = vweird.f32 %v509
    %vm517 = vmor %vm515, %vm516
    %v518 = vsel %vm517, %v509, %v514
    %v519 = vrsqrt.pop %v395
    %v520 = vmul.f32 %v519, %v395
    %v521 = vmul.f32 %v520, %v519
    %v522 = vmul.f32 0.5, %v521
    %v523 = vsub.f32 1.5, %v522
    %v524 = vmul.f32 %v519, %v523
    %vm525 = vweird.f32 %v395
    %vm526 = vweird.f32 %v519
    %vm527 = vmor %vm525, %vm526
    %v528 = vsel %vm527, %v519, %v524
    %v529 = vrsqrt.pop %v396
    %v530 = vmul.f32 %v529, %v396
    %v531 = vmul.f32 %v530, %v529
    %v532 = vmul.f32 0.5, %v531
    %v533 = vsub.f32 1.5, %v532
    %v534 = vmul.f32 %v529, %v533
    %vm535 = vweird.f32 %v396
    %vm536 = vweird.f32 %v529
    %vm537 = vmor %vm535, %vm536
    %v538 = vsel %vm537, %v529, %v534
    %v539 = vrsqrt.pop %v397
    %v540 = vmul.f32 %v539, %v397
    %v541 = vmul.f32 %v540, %v539
    %v542 = vmul.f32 0.5, %v541
    %v543 = vsub.f32 1.5, %v542
    %v544 = vmul.f32 %v539, %v543
    %vm545 = vweird.f32 %v397
    %vm546 = vweird.f32 %v539
    %vm547 = vmor %vm545, %vm546
    %v548 = vsel %vm547, %v539, %v544
    %v549 = vrsqrt.pop %v398
    %v550 = vmul.f32 %v549, %v398
    %v551 = vmul.f32 %v550, %v549
    %v552 = vmul.f32 0.5, %v551
    %v553 = vsub.f32 1.5, %v552
    %v554 = vmul.f32 %v549, %v553
    %vm555 = vweird.f32 %v398
    %vm556 = vweird.f32 %v549
    %vm557 = vmor %vm555, %vm556
    %v558 = vsel %vm557, %v549, %v554
    %v559 = vld [vmem:[#allocation2] sm:$0xff]
    %v560 = vld [vmem:[#allocation2 + $0x8] sm:$0xff]
    %v561 = vld [vmem:[#allocation2 + $0x10] sm:$0xff]
    %v562 = vld [vmem:[#allocation2 + $0x18] sm:$0xff]
    %v563 = vld [vmem:[#allocation2 + $0x20] sm:$0xff]
    %v564 = vld [vmem:[#allocation2 + $0x28] sm:$0xff]
    %v565 = vld [vmem:[#allocation2 + $0x30] sm:$0xff]
    %v566 = vld [vmem:[#allocation2 + $0x38] sm:$0xff]
    %v567 = vld [vmem:[#allocation2 + $0x40] sm:$0xff]
    %v568 = vld [vmem:[#allocation2 + $0x48] sm:$0xff]
    %v569 = vld [vmem:[#allocation2 + $0x50] sm:$0xff]
    %v570 = vld [vmem:[#allocation2 + $0x58] sm:$0xff]
    %v571 = vld [vmem:[#allocation2 + $0x60] sm:$0xff]
    %v572 = vld [vmem:[#allocation2 + $0x68] sm:$0xff]
    %v573 = vld [vmem:[#allocation2 + $0x70] sm:$0xff]
    %v574 = vld [vmem:[#allocation2 + $0x78] sm:$0xff]
    %576 = vset.pattern.permute.xlu0 0
    %577 = vperm.xlu0 %576, %v408
    %v578 = vpop.permute.xlu0 %577
    %581 = vset.pattern.permute.xlu0 0
    %582 = vperm.xlu0 %581, %v418
    %v583 = vpop.permute.xlu0 %582
    %586 = vset.pattern.permute.xlu0 0
    %587 = vperm.xlu0 %586, %v428
    %v588 = vpop.permute.xlu0 %587
    %591 = vset.pattern.permute.xlu0 0
    %592 = vperm.xlu0 %591, %v438
    %v593 = vpop.permute.xlu0 %592
    %596 = vset.pattern.permute.xlu0 0
    %597 = vperm.xlu0 %596, %v448
    %v598 = vpop.permute.xlu0 %597
    %601 = vset.pattern.permute.xlu0 0
    %602 = vperm.xlu0 %601, %v458
    %v603 = vpop.permute.xlu0 %602
    %606 = vset.pattern.permute.xlu0 0
    %607 = vperm.xlu0 %606, %v468
    %v608 = vpop.permute.xlu0 %607
    %611 = vset.pattern.permute.xlu0 0
    %612 = vperm.xlu0 %611, %v478
    %v613 = vpop.permute.xlu0 %612
    %616 = vset.pattern.permute.xlu0 0
    %617 = vperm.xlu0 %616, %v488
    %v618 = vpop.permute.xlu0 %617
    %621 = vset.pattern.permute.xlu0 0
    %622 = vperm.xlu0 %621, %v498
    %v623 = vpop.permute.xlu0 %622
    %626 = vset.pattern.permute.xlu0 0
    %627 = vperm.xlu0 %626, %v508
    %v628 = vpop.permute.xlu0 %627
    %631 = vset.pattern.permute.xlu0 0
    %632 = vperm.xlu0 %631, %v518
    %v633 = vpop.permute.xlu0 %632
    %636 = vset.pattern.permute.xlu0 0
    %637 = vperm.xlu0 %636, %v528
    %v638 = vpop.permute.xlu0 %637
    %641 = vset.pattern.permute.xlu0 0
    %642 = vperm.xlu0 %641, %v538
    %v643 = vpop.permute.xlu0 %642
    %646 = vset.pattern.permute.xlu0 0
    %647 = vperm.xlu0 %646, %v548
    %v648 = vpop.permute.xlu0 %647
    %651 = vset.pattern.permute.xlu0 0
    %652 = vperm.xlu0 %651, %v558
    %v653 = vpop.permute.xlu0 %652
    %v655 = vmul.f32 %v559, %v578
    %v656 = vmul.f32 %v560, %v583
    %v657 = vmul.f32 %v561, %v588
    %v658 = vmul.f32 %v562, %v593
    %v659 = vmul.f32 %v563, %v598
    %v660 = vmul.f32 %v564, %v603
    %v661 = vmul.f32 %v565, %v608
    %v662 = vmul.f32 %v566, %v613
    %v663 = vmul.f32 %v567, %v618
    %v664 = vmul.f32 %v568, %v623
    %v665 = vmul.f32 %v569, %v628
    %v666 = vmul.f32 %v570, %v633
    %v667 = vmul.f32 %v571, %v638
    %v668 = vmul.f32 %v572, %v643
    %v669 = vmul.f32 %v573, %v648
    %v670 = vmul.f32 %v574, %v653
    %v671 = vpack.c.bf16 %v655, %v655
    %v672 = vpack.c.bf16 %v656, %v656
    %v673 = vpack.c.bf16 %v657, %v657
    %v674 = vpack.c.bf16 %v658, %v658
    %v675 = vpack.c.bf16 %v659, %v659
    %v676 = vpack.c.bf16 %v660, %v660
    %v677 = vpack.c.bf16 %v661, %v661
    %v678 = vpack.c.bf16 %v662, %v662
    %v679 = vpack.c.bf16 %v663, %v663
    %v680 = vpack.c.bf16 %v664, %v664
    %v681 = vpack.c.bf16 %v665, %v665
    %v682 = vpack.c.bf16 %v666, %v666
    %v683 = vpack.c.bf16 %v667, %v667
    %v684 = vpack.c.bf16 %v668, %v668
    %v685 = vpack.c.bf16 %v669, %v669
    %v686 = vpack.c.bf16 %v670, %v670
    %687 = vst [vmem:[%s2] sm:$0xf] %v671
    %688 = vst [vmem:[%s2 + $0x4] sm:$0xf] %v672
    %689 = vst [vmem:[%s2 + $0x8] sm:$0xf] %v673
    %690 = vst [vmem:[%s2 + $0xc] sm:$0xf] %v674
    %691 = vst [vmem:[%s2 + $0x10] sm:$0xf] %v675
    %692 = vst [vmem:[%s2 + $0x14] sm:$0xf] %v676
    %693 = vst [vmem:[%s2 + $0x18] sm:$0xf] %v677
    %694 = vst [vmem:[%s2 + $0x1c] sm:$0xf] %v678
    %695 = vst [vmem:[%s2 + $0x20] sm:$0xf] %v679
    %696 = vst [vmem:[%s2 + $0x24] sm:$0xf] %v680
    %697 = vst [vmem:[%s2 + $0x28] sm:$0xf] %v681
    %698 = vst [vmem:[%s2 + $0x2c] sm:$0xf] %v682
    %699 = vst [vmem:[%s2 + $0x30] sm:$0xf] %v683
    %700 = vst [vmem:[%s2 + $0x34] sm:$0xf] %v684
    %701 = vst [vmem:[%s2 + $0x38] sm:$0xf] %v685
    %702 = vst [vmem:[%s2 + $0x3c] sm:$0xf] %v686
  $region17: #{a_call__.3} parent=0 // pred_fallthru
    _
  // Predicated region
  $region18: #{a_call__.3} parent=0 // pred_check
    _
  $region19: #{a_call__.3} parent=0 // pred_check_branch
    %704 = sbr.rel (0) target = $region21
  $region20: #{a_call__.3} parent=0 // pred_region
    _
  $region21: #{a_call__.3} parent=0 // pred_fallthru
    _
  // Predicated region
  $region22: #{a_call__.3} parent=0 // pred_check
    _
  $region23: #{a_call__.3} parent=0 // pred_check_branch
    %706 = sbr.rel (0) target = $region25
  $region24: #{a_call__.3} parent=0 // pred_region
    _
  $region25: #{a_call__.3} parent=0 // pred_fallthru
    _

// kernel: a_call__.5
$region0: #{a_call__.5}
  #allocation0 [shape = 'u32[]', space=smem, size = 0x4, offset = 0x4, fixed_abs, tag = 'smem constant byte address 0x4 - core index']
  #allocation1 [shape = 'u32[72,128]{1,0:T(1,128)}', space=vmem, size = 0x9000, scoped, tag = 'internal scratch']
  #allocation2 [shape = 'f32[128,128]{1,0:T(8,128)}', space=vmem, size = 0x10000, scoped, tag = 'scratch operand']
  #allocation3 [shape = 'f32[128,1]{1,0:T(8,128)}', space=vmem, size = 0x10000, scoped, tag = 'scratch operand']
  %s0 = inlined_call_operand.vmem [shape: bf16[128,4], index: 0, kind: input, shape index: {}]
  %s1 = inlined_call_operand.vmem [shape: bf16[4,128], index: 1, kind: input, shape index: {}]
  %s2 = inlined_call_operand.vmem [shape: bf16[128,128], index: 2, kind: input, shape index: {}]
  %s3 = inlined_call_operand.vmem [shape: bf16[128,128], index: 3, kind: output, shape index: {}]
  %s4 = sld [smem:[#allocation0]]
  $region30: #{a_call__.5} parent=0
    _
  %s6 = ssub.s32 1, %s4
  %s7 = scalar_select 0, %s6, %s4
  // Predicated region
  $region2: #{a_call__.5} parent=0 // pred_check
    _
  $region3: #{a_call__.5} parent=0 // pred_check_branch
    %9 = sbr.rel (0) target = $region5
  $region4: #{a_call__.5} parent=0 // pred_region
    _
  $region5: #{a_call__.5} parent=0 // pred_fallthru
    _
  // Predicated region
  $region6: #{a_call__.5} parent=0 // pred_check
    _
  $region7: #{a_call__.5} parent=0 // pred_check_branch
    %11 = sbr.rel (0) target = $region9
  $region8: #{a_call__.5} parent=0 // pred_region
    _
  $region9: #{a_call__.5} parent=0 // pred_fallthru
    _
  // Predicated region
  $region10: #{a_call__.5} parent=0 // pred_check
    _
  $region11: #{a_call__.5} parent=0 // pred_check_branch
    %13 = sbr.rel (0) target = $region13
  $region12: #{a_call__.5} parent=0 // pred_region
    _
  $region13: #{a_call__.5} parent=0 // pred_fallthru
    _
  %p15 = scmp.eq.s32.totalorder 0, 0
  // Predicated region
  $region14: #{a_call__.5} parent=0 // pred_check
    %p16 = pneg %p15
  $region15: #{a_call__.5} parent=0 // pred_check_branch
    %18 = sbr.rel (%p16) target = $region17
  $region16: #{a_call__.5} parent=0 // pred_region
    %19 = vst [vmem:[#allocation2] sm:$0xff] 0.0
    %20 = vst [vmem:[#allocation2 + $0x8] sm:$0xff] 0.0
    %21 = vst [vmem:[#allocation2 + $0x10] sm:$0xff] 0.0
    %22 = vst [vmem:[#allocation2 + $0x18] sm:$0xff] 0.0
    %23 = vst [vmem:[#allocation2 + $0x20] sm:$0xff] 0.0
    %24 = vst [vmem:[#allocation2 + $0x28] sm:$0xff] 0.0
    %25 = vst [vmem:[#allocation2 + $0x30] sm:$0xff] 0.0
    %26 = vst [vmem:[#allocation2 + $0x38] sm:$0xff] 0.0
    %27 = vst [vmem:[#allocation2 + $0x40] sm:$0xff] 0.0
    %28 = vst [vmem:[#allocation2 + $0x48] sm:$0xff] 0.0
    %29 = vst [vmem:[#allocation2 + $0x50] sm:$0xff] 0.0
    %30 = vst [vmem:[#allocation2 + $0x58] sm:$0xff] 0.0
    %31 = vst [vmem:[#allocation2 + $0x60] sm:$0xff] 0.0
    %32 = vst [vmem:[#allocation2 + $0x68] sm:$0xff] 0.0
    %33 = vst [vmem:[#allocation2 + $0x70] sm:$0xff] 0.0
    %34 = vst [vmem:[#allocation2 + $0x78] sm:$0xff] 0.0
    %vm35 = vcmask 7168
    %36 = vst.msk [vmem:[#allocation3] sm:$0xff] %vm35, 0.0
    %37 = vst.msk [vmem:[#allocation3 + $0x8] sm:$0xff] %vm35, 0.0
    %38 = vst.msk [vmem:[#allocation3 + $0x10] sm:$0xff] %vm35, 0.0
    %39 = vst.msk [vmem:[#allocation3 + $0x18] sm:$0xff] %vm35, 0.0
    %40 = vst.msk [vmem:[#allocation3 + $0x20] sm:$0xff] %vm35, 0.0
    %41 = vst.msk [vmem:[#allocation3 + $0x28] sm:$0xff] %vm35, 0.0
    %42 = vst.msk [vmem:[#allocation3 + $0x30] sm:$0xff] %vm35, 0.0
    %43 = vst.msk [vmem:[#allocation3 + $0x38] sm:$0xff] %vm35, 0.0
    %44 = vst.msk [vmem:[#allocation3 + $0x40] sm:$0xff] %vm35, 0.0
    %45 = vst.msk [vmem:[#allocation3 + $0x48] sm:$0xff] %vm35, 0.0
    %46 = vst.msk [vmem:[#allocation3 + $0x50] sm:$0xff] %vm35, 0.0
    %47 = vst.msk [vmem:[#allocation3 + $0x58] sm:$0xff] %vm35, 0.0
    %48 = vst.msk [vmem:[#allocation3 + $0x60] sm:$0xff] %vm35, 0.0
    %49 = vst.msk [vmem:[#allocation3 + $0x68] sm:$0xff] %vm35, 0.0
    %50 = vst.msk [vmem:[#allocation3 + $0x70] sm:$0xff] %vm35, 0.0
    %51 = vst.msk [vmem:[#allocation3 + $0x78] sm:$0xff] %vm35, 0.0
  $region17: #{a_call__.5} parent=0 // pred_fallthru
    _
  %v52 = vld [vmem:[%s0] sm:$0xf]
  %v53 = vld [vmem:[%s0 + $0x4] sm:$0xf]
  %v54 = vld [vmem:[%s0 + $0x8] sm:$0xf]
  %v55 = vld [vmem:[%s0 + $0xc] sm:$0xf]
  %v56 = vld [vmem:[%s0 + $0x10] sm:$0xf]
  %v57 = vld [vmem:[%s0 + $0x14] sm:$0xf]
  %v58 = vld [vmem:[%s0 + $0x18] sm:$0xf]
  %v59 = vld [vmem:[%s0 + $0x1c] sm:$0xf]
  %v60 = vld [vmem:[%s0 + $0x20] sm:$0xf]
  %v61 = vld [vmem:[%s0 + $0x24] sm:$0xf]
  %v62 = vld [vmem:[%s0 + $0x28] sm:$0xf]
  %v63 = vld [vmem:[%s0 + $0x2c] sm:$0xf]
  %v64 = vld [vmem:[%s0 + $0x30] sm:$0xf]
  %v65 = vld [vmem:[%s0 + $0x34] sm:$0xf]
  %v66 = vld [vmem:[%s0 + $0x38] sm:$0xf]
  %v67 = vld [vmem:[%s0 + $0x3c] sm:$0xf]
  %v68 = vld [vmem:[#allocation2] sm:$0xff]
  %v69 = vld [vmem:[#allocation2 + $0x8] sm:$0xff]
  %v70 = vld [vmem:[#allocation2 + $0x10] sm:$0xff]
  %v71 = vld [vmem:[#allocation2 + $0x18] sm:$0xff]
  %v72 = vld [vmem:[#allocation2 + $0x20] sm:$0xff]
  %v73 = vld [vmem:[#allocation2 + $0x28] sm:$0xff]
  %v74 = vld [vmem:[#allocation2 + $0x30] sm:$0xff]
  %v75 = vld [vmem:[#allocation2 + $0x38] sm:$0xff]
  %v76 = vld [vmem:[#allocation2 + $0x40] sm:$0xff]
  %v77 = vld [vmem:[#allocation2 + $0x48] sm:$0xff]
  %v78 = vld [vmem:[#allocation2 + $0x50] sm:$0xff]
  %v79 = vld [vmem:[#allocation2 + $0x58] sm:$0xff]
  %v80 = vld [vmem:[#allocation2 + $0x60] sm:$0xff]
  %v81 = vld [vmem:[#allocation2 + $0x68] sm:$0xff]
  %v82 = vld [vmem:[#allocation2 + $0x70] sm:$0xff]
  %v83 = vld [vmem:[#allocation2 + $0x78] sm:$0xff]
  %v84 = vld [vmem:[%s1] sm:$0x3]
  %v101 = vunpack.c.l.b16 %v52
  %v102 = vunpack.c.l.b16 %v53
  %v103 = vunpack.c.l.b16 %v54
  %v104 = vunpack.c.l.b16 %v55
  %v105 = vunpack.c.l.b16 %v56
  %v106 = vunpack.c.l.b16 %v57
  %v107 = vunpack.c.l.b16 %v58
  %v108 = vunpack.c.l.b16 %v59
  %v109 = vunpack.c.l.b16 %v60
  %v110 = vunpack.c.l.b16 %v61
  %v111 = vunpack.c.l.b16 %v62
  %v112 = vunpack.c.l.b16 %v63
  %v113 = vunpack.c.l.b16 %v64
  %v114 = vunpack.c.l.b16 %v65
  %v115 = vunpack.c.l.b16 %v66
  %v116 = vunpack.c.l.b16 %v67
  %v117 = vpack.c.b16 %v102, %v101
  %v118 = vpack.c.b16 %v104, %v103
  %v119 = vpack.c.b16 %v106, %v105
  %v120 = vpack.c.b16 %v108, %v107
  %v121 = vpack.c.b16 %v110, %v109
  %v122 = vpack.c.b16 %v112, %v111
  %v123 = vpack.c.b16 %v114, %v113
  %v124 = vpack.c.b16 %v116, %v115
  %vm125 = vcmask 31744
  %v127 = vsel %vm125, %v117, 0
  %v130 = vsel %vm125, %v118, 0
  %v133 = vsel %vm125, %v119, 0
  %v136 = vsel %vm125, %v120, 0
  %v139 = vsel %vm125, %v121, 0
  %v142 = vsel %vm125, %v122, 0
  %v145 = vsel %vm125, %v123, 0
  %v148 = vsel %vm125, %v124, 0
  %vm150 = vcmask 1041408
  %v152 = vsel %vm150, %v84, 0
  %154 = vmatpush.bf16.msra.mxu0 0
  %155 = vmatpush.bf16.msra.mxu0 0
  %156 = vmatpush.bf16.msra.mxu0 0
  %157 = vmatpush.bf16.msra.mxu0 0
  %158 = vmatpush.bf16.msra.mxu0 0
  %159 = vmatpush.bf16.msra.mxu0 0
  %160 = vmatpush.bf16.msra.mxu0 0
  %161 = vmatpush.bf16.msra.mxu0 %v152
  %162 = vmatmul.bf16.gmra.mxu0 %v127
  %v163 = vpop.f32.mrf.mxu0
  %v164 = vadd.f32 0.0, %v163
  %v165 = vpop.f32.mrf.mxu0
  %v166 = vadd.f32 0.0, %v165
  %167 = vmatmul.bf16.gmra.mxu0 %v130
  %v168 = vpop.f32.mrf.mxu0
  %v169 = vadd.f32 0.0, %v168
  %v170 = vpop.f32.mrf.mxu0
  %v171 = vadd.f32 0.0, %v170
  %172 = vmatmul.bf16.gmra.mxu0 %v133
  %v173 = vpop.f32.mrf.mxu0
  %v174 = vadd.f32 0.0, %v173
  %v175 = vpop.f32.mrf.mxu0
  %v176 = vadd.f32 0.0, %v175
  %177 = vmatmul.bf16.gmra.mxu0 %v136
  %v178 = vpop.f32.mrf.mxu0
  %v179 = vadd.f32 0.0, %v178
  %v180 = vpop.f32.mrf.mxu0
  %v181 = vadd.f32 0.0, %v180
  %182 = vmatmul.bf16.gmra.mxu0 %v139
  %v183 = vpop.f32.mrf.mxu0
  %v184 = vadd.f32 0.0, %v183
  %v185 = vpop.f32.mrf.mxu0
  %v186 = vadd.f32 0.0, %v185
  %187 = vmatmul.bf16.gmra.mxu0 %v142
  %v188 = vpop.f32.mrf.mxu0
  %v189 = vadd.f32 0.0, %v188
  %v190 = vpop.f32.mrf.mxu0
  %v191 = vadd.f32 0.0, %v190
  %192 = vmatmul.bf16.gmra.mxu0 %v145
  %v193 = vpop.f32.mrf.mxu0
  %v194 = vadd.f32 0.0, %v193
  %v195 = vpop.f32.mrf.mxu0
  %v196 = vadd.f32 0.0, %v195
  %197 = vmatmul.bf16.gmra.mxu0 %v148
  %v198 = vpop.f32.mrf.mxu0
  %v199 = vadd.f32 0.0, %v198
  %v200 = vpop.f32.mrf.mxu0
  %v201 = vadd.f32 0.0, %v200
  %202 = vdwg.mxu0
  %v203 = vadd.f32 %v68, %v164
  %v204 = vadd.f32 %v69, %v166
  %v205 = vadd.f32 %v70, %v169
  %v206 = vadd.f32 %v71, %v171
  %v207 = vadd.f32 %v72, %v174
  %v208 = vadd.f32 %v73, %v176
  %v209 = vadd.f32 %v74, %v179
  %v210 = vadd.f32 %v75, %v181
  %v211 = vadd.f32 %v76, %v184
  %v212 = vadd.f32 %v77, %v186
  %v213 = vadd.f32 %v78, %v189
  %v214 = vadd.f32 %v79, %v191
  %v215 = vadd.f32 %v80, %v194
  %v216 = vadd.f32 %v81, %v196
  %v217 = vadd.f32 %v82, %v199
  %v218 = vadd.f32 %v83, %v201
  %219 = vst [vmem:[#allocation2] sm:$0xff] %v203
  %220 = vst [vmem:[#allocation2 + $0x8] sm:$0xff] %v204
  %221 = vst [vmem:[#allocation2 + $0x10] sm:$0xff] %v205
  %222 = vst [vmem:[#allocation2 + $0x18] sm:$0xff] %v206
  %223 = vst [vmem:[#allocation2 + $0x20] sm:$0xff] %v207
  %224 = vst [vmem:[#allocation2 + $0x28] sm:$0xff] %v208
  %225 = vst [vmem:[#allocation2 + $0x30] sm:$0xff] %v209
  %226 = vst [vmem:[#allocation2 + $0x38] sm:$0xff] %v210
  %227 = vst [vmem:[#allocation2 + $0x40] sm:$0xff] %v211
  %228 = vst [vmem:[#allocation2 + $0x48] sm:$0xff] %v212
  %229 = vst [vmem:[#allocation2 + $0x50] sm:$0xff] %v213
  %230 = vst [vmem:[#allocation2 + $0x58] sm:$0xff] %v214
  %231 = vst [vmem:[#allocation2 + $0x60] sm:$0xff] %v215
  %232 = vst [vmem:[#allocation2 + $0x68] sm:$0xff] %v216
  %233 = vst [vmem:[#allocation2 + $0x70] sm:$0xff] %v217
  %234 = vst [vmem:[#allocation2 + $0x78] sm:$0xff] %v218
  %v235 = vunpack.c.l.bf16 %v52
  %v236 = vunpack.c.l.bf16 %v53
  %v237 = vunpack.c.l.bf16 %v54
  %v238 = vunpack.c.l.bf16 %v55
  %v239 = vunpack.c.l.bf16 %v56
  %v240 = vunpack.c.l.bf16 %v57
  %v241 = vunpack.c.l.bf16 %v58
  %v242 = vunpack.c.l.bf16 %v59
  %v243 = vunpack.c.l.bf16 %v60
  %v244 = vunpack.c.l.bf16 %v61
  %v245 = vunpack.c.l.bf16 %v62
  %v246 = vunpack.c.l.bf16 %v63
  %v247 = vunpack.c.l.bf16 %v64
  %v248 = vunpack.c.l.bf16 %v65
  %v249 = vunpack.c.l.bf16 %v66
  %v250 = vunpack.c.l.bf16 %v67
  %v251 = vld [vmem:[#allocation3] sm:$0xff]
  %v252 = vld [vmem:[#allocation3 + $0x8] sm:$0xff]
  %v253 = vld [vmem:[#allocation3 + $0x10] sm:$0xff]
  %v254 = vld [vmem:[#allocation3 + $0x18] sm:$0xff]
  %v255 = vld [vmem:[#allocation3 + $0x20] sm:$0xff]
  %v256 = vld [vmem:[#allocation3 + $0x28] sm:$0xff]
  %v257 = vld [vmem:[#allocation3 + $0x30] sm:$0xff]
  %v258 = vld [vmem:[#allocation3 + $0x38] sm:$0xff]
  %v259 = vld [vmem:[#allocation3 + $0x40] sm:$0xff]
  %v260 = vld [vmem:[#allocation3 + $0x48] sm:$0xff]
  %v261 = vld [vmem:[#allocation3 + $0x50] sm:$0xff]
  %v262 = vld [vmem:[#allocation3 + $0x58] sm:$0xff]
  %v263 = vld [vmem:[#allocation3 + $0x60] sm:$0xff]
  %v264 = vld [vmem:[#allocation3 + $0x68] sm:$0xff]
  %v265 = vld [vmem:[#allocation3 + $0x70] sm:$0xff]
  %v266 = vld [vmem:[#allocation3 + $0x78] sm:$0xff]
  %v267 = vmul.f32 %v235, %v235
  %v268 = vmul.f32 %v236, %v236
  %v269 = vmul.f32 %v237, %v237
  %v270 = vmul.f32 %v238, %v238
  %v271 = vmul.f32 %v239, %v239
  %v272 = vmul.f32 %v240, %v240
  %v273 = vmul.f32 %v241, %v241
  %v274 = vmul.f32 %v242, %v242
  %v275 = vmul.f32 %v243, %v243
  %v276 = vmul.f32 %v244, %v244
  %v277 = vmul.f32 %v245, %v245
  %v278 = vmul.f32 %v246, %v246
  %v279 = vmul.f32 %v247, %v247
  %v280 = vmul.f32 %v248, %v248
  %v281 = vmul.f32 %v249, %v249
  %v282 = vmul.f32 %v250, %v250
  %v283 = vsel %vm125, %v267, 0.0
  %284 = vadd.xlane.f32.xlu0 %v283
  %v285 = vpop.xlane.xlu0 %284
  %v286 = vsel %vm125, %v268, 0.0
  %287 = vadd.xlane.f32.xlu0 %v286
  %v288 = vpop.xlane.xlu0 %287
  %v289 = vsel %vm125, %v269, 0.0
  %290 = vadd.xlane.f32.xlu0 %v289
  %v291 = vpop.xlane.xlu0 %290
  %v292 = vsel %vm125, %v270, 0.0
  %293 = vadd.xlane.f32.xlu0 %v292
  %v294 = vpop.xlane.xlu0 %293
  %v295 = vsel %vm125, %v271, 0.0
  %296 = vadd.xlane.f32.xlu0 %v295
  %v297 = vpop.xlane.xlu0 %296
  %v298 = vsel %vm125, %v272, 0.0
  %299 = vadd.xlane.f32.xlu0 %v298
  %v300 = vpop.xlane.xlu0 %299
  %v301 = vsel %vm125, %v273, 0.0
  %302 = vadd.xlane.f32.xlu0 %v301
  %v303 = vpop.xlane.xlu0 %302
  %v304 = vsel %vm125, %v274, 0.0
  %305 = vadd.xlane.f32.xlu0 %v304
  %v306 = vpop.xlane.xlu0 %305
  %v307 = vsel %vm125, %v275, 0.0
  %308 = vadd.xlane.f32.xlu0 %v307
  %v309 = vpop.xlane.xlu0 %308
  %v310 = vsel %vm125, %v276, 0.0
  %311 = vadd.xlane.f32.xlu0 %v310
  %v312 = vpop.xlane.xlu0 %311
  %v313 = vsel %vm125, %v277, 0.0
  %314 = vadd.xlane.f32.xlu0 %v313
  %v315 = vpop.xlane.xlu0 %314
  %v316 = vsel %vm125, %v278, 0.0
  %317 = vadd.xlane.f32.xlu0 %v316
  %v318 = vpop.xlane.xlu0 %317
  %v319 = vsel %vm125, %v279, 0.0
  %320 = vadd.xlane.f32.xlu0 %v319
  %v321 = vpop.xlane.xlu0 %320
  %v322 = vsel %vm125, %v280, 0.0
  %323 = vadd.xlane.f32.xlu0 %v322
  %v324 = vpop.xlane.xlu0 %323
  %v325 = vsel %vm125, %v281, 0.0
  %326 = vadd.xlane.f32.xlu0 %v325
  %v327 = vpop.xlane.xlu0 %326
  %v328 = vsel %vm125, %v282, 0.0
  %329 = vadd.xlane.f32.xlu0 %v328
  %v330 = vpop.xlane.xlu0 %329
  %v331 = vadd.f32 %v251, %v285
  %v332 = vadd.f32 %v252, %v288
  %v333 = vadd.f32 %v253, %v291
  %v334 = vadd.f32 %v254, %v294
  %v335 = vadd.f32 %v255, %v297
  %v336 = vadd.f32 %v256, %v300
  %v337 = vadd.f32 %v257, %v303
  %v338 = vadd.f32 %v258, %v306
  %v339 = vadd.f32 %v259, %v309
  %v340 = vadd.f32 %v260, %v312
  %v341 = vadd.f32 %v261, %v315
  %v342 = vadd.f32 %v262, %v318
  %v343 = vadd.f32 %v263, %v321
  %v344 = vadd.f32 %v264, %v324
  %v345 = vadd.f32 %v265, %v327
  %v346 = vadd.f32 %v266, %v330
  %vm347 = vcmask 7168
  %348 = vst.msk [vmem:[#allocation3] sm:$0xff] %vm347, %v331
  %349 = vst.msk [vmem:[#allocation3 + $0x8] sm:$0xff] %vm347, %v332
  %350 = vst.msk [vmem:[#allocation3 + $0x10] sm:$0xff] %vm347, %v333
  %351 = vst.msk [vmem:[#allocation3 + $0x18] sm:$0xff] %vm347, %v334
  %352 = vst.msk [vmem:[#allocation3 + $0x20] sm:$0xff] %vm347, %v335
  %353 = vst.msk [vmem:[#allocation3 + $0x28] sm:$0xff] %vm347, %v336
  %354 = vst.msk [vmem:[#allocation3 + $0x30] sm:$0xff] %vm347, %v337
  %355 = vst.msk [vmem:[#allocation3 + $0x38] sm:$0xff] %vm347, %v338
  %356 = vst.msk [vmem:[#allocation3 + $0x40] sm:$0xff] %vm347, %v339
  %357 = vst.msk [vmem:[#allocation3 + $0x48] sm:$0xff] %vm347, %v340
  %358 = vst.msk [vmem:[#allocation3 + $0x50] sm:$0xff] %vm347, %v341
  %359 = vst.msk [vmem:[#allocation3 + $0x58] sm:$0xff] %vm347, %v342
  %360 = vst.msk [vmem:[#allocation3 + $0x60] sm:$0xff] %vm347, %v343
  %361 = vst.msk [vmem:[#allocation3 + $0x68] sm:$0xff] %vm347, %v344
  %362 = vst.msk [vmem:[#allocation3 + $0x70] sm:$0xff] %vm347, %v345
  %363 = vst.msk [vmem:[#allocation3 + $0x78] sm:$0xff] %vm347, %v346
  // Predicated region
  $region18: #{a_call__.5} parent=0 // pred_check
    %p364 = pneg %p15
  $region19: #{a_call__.5} parent=0 // pred_check_branch
    %366 = sbr.rel (%p364) target = $region21
  $region20: #{a_call__.5} parent=0 // pred_region
    %v367 = vld [vmem:[#allocation3] sm:$0xff]
    %v368 = vld [vmem:[#allocation3 + $0x8] sm:$0xff]
    %v369 = vld [vmem:[#allocation3 + $0x10] sm:$0xff]
    %v370 = vld [vmem:[#allocation3 + $0x18] sm:$0xff]
    %v371 = vld [vmem:[#allocation3 + $0x20] sm:$0xff]
    %v372 = vld [vmem:[#allocation3 + $0x28] sm:$0xff]
    %v373 = vld [vmem:[#allocation3 + $0x30] sm:$0xff]
    %v374 = vld [vmem:[#allocation3 + $0x38] sm:$0xff]
    %v375 = vld [vmem:[#allocation3 + $0x40] sm:$0xff]
    %v376 = vld [vmem:[#allocation3 + $0x48] sm:$0xff]
    %v377 = vld [vmem:[#allocation3 + $0x50] sm:$0xff]
    %v378 = vld [vmem:[#allocation3 + $0x58] sm:$0xff]
    %v379 = vld [vmem:[#allocation3 + $0x60] sm:$0xff]
    %v380 = vld [vmem:[#allocation3 + $0x68] sm:$0xff]
    %v381 = vld [vmem:[#allocation3 + $0x70] sm:$0xff]
    %v382 = vld [vmem:[#allocation3 + $0x78] sm:$0xff]
    %v383 = vmax.f32 %v367, 1e-24
    %v384 = vmax.f32 %v368, 1e-24
    %v385 = vmax.f32 %v369, 1e-24
    %v386 = vmax.f32 %v370, 1e-24
    %v387 = vmax.f32 %v371, 1e-24
    %v388 = vmax.f32 %v372, 1e-24
    %v389 = vmax.f32 %v373, 1e-24
    %v390 = vmax.f32 %v374, 1e-24
    %v391 = vmax.f32 %v375, 1e-24
    %v392 = vmax.f32 %v376, 1e-24
    %v393 = vmax.f32 %v377, 1e-24
    %v394 = vmax.f32 %v378, 1e-24
    %v395 = vmax.f32 %v379, 1e-24
    %v396 = vmax.f32 %v380, 1e-24
    %v397 = vmax.f32 %v381, 1e-24
    %v398 = vmax.f32 %v382, 1e-24
    %v399 = vrsqrt.pop %v383
    %v400 = vmul.f32 %v399, %v383
    %v401 = vmul.f32 %v400, %v399
    %v402 = vmul.f32 0.5, %v401
    %v403 = vsub.f32 1.5, %v402
    %v404 = vmul.f32 %v399, %v403
    %vm405 = vweird.f32 %v383
    %vm406 = vweird.f32 %v399
    %vm407 = vmor %vm405, %vm406
    %v408 = vsel %vm407, %v399, %v404
    %v409 = vrsqrt.pop %v384
    %v410 = vmul.f32 %v409, %v384
    %v411 = vmul.f32 %v410, %v409
    %v412 = vmul.f32 0.5, %v411
    %v413 = vsub.f32 1.5, %v412
    %v414 = vmul.f32 %v409, %v413
    %vm415 = vweird.f32 %v384
    %vm416 = vweird.f32 %v409
    %vm417 = vmor %vm415, %vm416
    %v418 = vsel %vm417, %v409, %v414
    %v419 = vrsqrt.pop %v385
    %v420 = vmul.f32 %v419, %v385
    %v421 = vmul.f32 %v420, %v419
    %v422 = vmul.f32 0.5, %v421
    %v423 = vsub.f32 1.5, %v422
    %v424 = vmul.f32 %v419, %v423
    %vm425 = vweird.f32 %v385
    %vm426 = vweird.f32 %v419
    %vm427 = vmor %vm425, %vm426
    %v428 = vsel %vm427, %v419, %v424
    %v429 = vrsqrt.pop %v386
    %v430 = vmul.f32 %v429, %v386
    %v431 = vmul.f32 %v430, %v429
    %v432 = vmul.f32 0.5, %v431
    %v433 = vsub.f32 1.5, %v432
    %v434 = vmul.f32 %v429, %v433
    %vm435 = vweird.f32 %v386
    %vm436 = vweird.f32 %v429
    %vm437 = vmor %vm435, %vm436
    %v438 = vsel %vm437, %v429, %v434
    %v439 = vrsqrt.pop %v387
    %v440 = vmul.f32 %v439, %v387
    %v441 = vmul.f32 %v440, %v439
    %v442 = vmul.f32 0.5, %v441
    %v443 = vsub.f32 1.5, %v442
    %v444 = vmul.f32 %v439, %v443
    %vm445 = vweird.f32 %v387
    %vm446 = vweird.f32 %v439
    %vm447 = vmor %vm445, %vm446
    %v448 = vsel %vm447, %v439, %v444
    %v449 = vrsqrt.pop %v388
    %v450 = vmul.f32 %v449, %v388
    %v451 = vmul.f32 %v450, %v449
    %v452 = vmul.f32 0.5, %v451
    %v453 = vsub.f32 1.5, %v452
    %v454 = vmul.f32 %v449, %v453
    %vm455 = vweird.f32 %v388
    %vm456 = vweird.f32 %v449
    %vm457 = vmor %vm455, %vm456
    %v458 = vsel %vm457, %v449, %v454
    %v459 = vrsqrt.pop %v389
    %v460 = vmul.f32 %v459, %v389
    %v461 = vmul.f32 %v460, %v459
    %v462 = vmul.f32 0.5, %v461
    %v463 = vsub.f32 1.5, %v462
    %v464 = vmul.f32 %v459, %v463
    %vm465 = vweird.f32 %v389
    %vm466 = vweird.f32 %v459
    %vm467 = vmor %vm465, %vm466
    %v468 = vsel %vm467, %v459, %v464
    %v469 = vrsqrt.pop %v390
    %v470 = vmul.f32 %v469, %v390
    %v471 = vmul.f32 %v470, %v469
    %v472 = vmul.f32 0.5, %v471
    %v473 = vsub.f32 1.5, %v472
    %v474 = vmul.f32 %v469, %v473
    %vm475 = vweird.f32 %v390
    %vm476 = vweird.f32 %v469
    %vm477 = vmor %vm475, %vm476
    %v478 = vsel %vm477, %v469, %v474
    %v479 = vrsqrt.pop %v391
    %v480 = vmul.f32 %v479, %v391
    %v481 = vmul.f32 %v480, %v479
    %v482 = vmul.f32 0.5, %v481
    %v483 = vsub.f32 1.5, %v482
    %v484 = vmul.f32 %v479, %v483
    %vm485 = vweird.f32 %v391
    %vm486 = vweird.f32 %v479
    %vm487 = vmor %vm485, %vm486
    %v488 = vsel %vm487, %v479, %v484
    %v489 = vrsqrt.pop %v392
    %v490 = vmul.f32 %v489, %v392
    %v491 = vmul.f32 %v490, %v489
    %v492 = vmul.f32 0.5, %v491
    %v493 = vsub.f32 1.5, %v492
    %v494 = vmul.f32 %v489, %v493
    %vm495 = vweird.f32 %v392
    %vm496 = vweird.f32 %v489
    %vm497 = vmor %vm495, %vm496
    %v498 = vsel %vm497, %v489, %v494
    %v499 = vrsqrt.pop %v393
    %v500 = vmul.f32 %v499, %v393
    %v501 = vmul.f32 %v500, %v499
    %v502 = vmul.f32 0.5, %v501
    %v503 = vsub.f32 1.5, %v502
    %v504 = vmul.f32 %v499, %v503
    %vm505 = vweird.f32 %v393
    %vm506 = vweird.f32 %v499
    %vm507 = vmor %vm505, %vm506
    %v508 = vsel %vm507, %v499, %v504
    %v509 = vrsqrt.pop %v394
    %v510 = vmul.f32 %v509, %v394
    %v511 = vmul.f32 %v510, %v509
    %v512 = vmul.f32 0.5, %v511
    %v513 = vsub.f32 1.5, %v512
    %v514 = vmul.f32 %v509, %v513
    %vm515 = vweird.f32 %v394
    %vm516 = vweird.f32 %v509
    %vm517 = vmor %vm515, %vm516
    %v518 = vsel %vm517, %v509, %v514
    %v519 = vrsqrt.pop %v395
    %v520 = vmul.f32 %v519, %v395
    %v521 = vmul.f32 %v520, %v519
    %v522 = vmul.f32 0.5, %v521
    %v523 = vsub.f32 1.5, %v522
    %v524 = vmul.f32 %v519, %v523
    %vm525 = vweird.f32 %v395
    %vm526 = vweird.f32 %v519
    %vm527 = vmor %vm525, %vm526
    %v528 = vsel %vm527, %v519, %v524
    %v529 = vrsqrt.pop %v396
    %v530 = vmul.f32 %v529, %v396
    %v531 = vmul.f32 %v530, %v529
    %v532 = vmul.f32 0.5, %v531
    %v533 = vsub.f32 1.5, %v532
    %v534 = vmul.f32 %v529, %v533
    %vm535 = vweird.f32 %v396
    %vm536 = vweird.f32 %v529
    %vm537 = vmor %vm535, %vm536
    %v538 = vsel %vm537, %v529, %v534
    %v539 = vrsqrt.pop %v397
    %v540 = vmul.f32 %v539, %v397
    %v541 = vmul.f32 %v540, %v539
    %v542 = vmul.f32 0.5, %v541
    %v543 = vsub.f32 1.5, %v542
    %v544 = vmul.f32 %v539, %v543
    %vm545 = vweird.f32 %v397
    %vm546 = vweird.f32 %v539
    %vm547 = vmor %vm545, %vm546
    %v548 = vsel %vm547, %v539, %v544
    %v549 = vrsqrt.pop %v398
    %v550 = vmul.f32 %v549, %v398
    %v551 = vmul.f32 %v550, %v549
    %v552 = vmul.f32 0.5, %v551
    %v553 = vsub.f32 1.5, %v552
    %v554 = vmul.f32 %v549, %v553
    %vm555 = vweird.f32 %v398
    %vm556 = vweird.f32 %v549
    %vm557 = vmor %vm555, %vm556
    %v558 = vsel %vm557, %v549, %v554
    %v559 = vld [vmem:[#allocation2] sm:$0xff]
    %v560 = vld [vmem:[#allocation2 + $0x8] sm:$0xff]
    %v561 = vld [vmem:[#allocation2 + $0x10] sm:$0xff]
    %v562 = vld [vmem:[#allocation2 + $0x18] sm:$0xff]
    %v563 = vld [vmem:[#allocation2 + $0x20] sm:$0xff]
    %v564 = vld [vmem:[#allocation2 + $0x28] sm:$0xff]
    %v565 = vld [vmem:[#allocation2 + $0x30] sm:$0xff]
    %v566 = vld [vmem:[#allocation2 + $0x38] sm:$0xff]
    %v567 = vld [vmem:[#allocation2 + $0x40] sm:$0xff]
    %v568 = vld [vmem:[#allocation2 + $0x48] sm:$0xff]
    %v569 = vld [vmem:[#allocation2 + $0x50] sm:$0xff]
    %v570 = vld [vmem:[#allocation2 + $0x58] sm:$0xff]
    %v571 = vld [vmem:[#allocation2 + $0x60] sm:$0xff]
    %v572 = vld [vmem:[#allocation2 + $0x68] sm:$0xff]
    %v573 = vld [vmem:[#allocation2 + $0x70] sm:$0xff]
    %v574 = vld [vmem:[#allocation2 + $0x78] sm:$0xff]
    %576 = vset.pattern.permute.xlu0 0
    %577 = vperm.xlu0 %576, %v408
    %v578 = vpop.permute.xlu0 %577
    %581 = vset.pattern.permute.xlu0 0
    %582 = vperm.xlu0 %581, %v418
    %v583 = vpop.permute.xlu0 %582
    %586 = vset.pattern.permute.xlu0 0
    %587 = vperm.xlu0 %586, %v428
    %v588 = vpop.permute.xlu0 %587
    %591 = vset.pattern.permute.xlu0 0
    %592 = vperm.xlu0 %591, %v438
    %v593 = vpop.permute.xlu0 %592
    %596 = vset.pattern.permute.xlu0 0
    %597 = vperm.xlu0 %596, %v448
    %v598 = vpop.permute.xlu0 %597
    %601 = vset.pattern.permute.xlu0 0
    %602 = vperm.xlu0 %601, %v458
    %v603 = vpop.permute.xlu0 %602
    %606 = vset.pattern.permute.xlu0 0
    %607 = vperm.xlu0 %606, %v468
    %v608 = vpop.permute.xlu0 %607
    %611 = vset.pattern.permute.xlu0 0
    %612 = vperm.xlu0 %611, %v478
    %v613 = vpop.permute.xlu0 %612
    %616 = vset.pattern.permute.xlu0 0
    %617 = vperm.xlu0 %616, %v488
    %v618 = vpop.permute.xlu0 %617
    %621 = vset.pattern.permute.xlu0 0
    %622 = vperm.xlu0 %621, %v498
    %v623 = vpop.permute.xlu0 %622
    %626 = vset.pattern.permute.xlu0 0
    %627 = vperm.xlu0 %626, %v508
    %v628 = vpop.permute.xlu0 %627
    %631 = vset.pattern.permute.xlu0 0
    %632 = vperm.xlu0 %631, %v518
    %v633 = vpop.permute.xlu0 %632
    %636 = vset.pattern.permute.xlu0 0
    %637 = vperm.xlu0 %636, %v528
    %v638 = vpop.permute.xlu0 %637
    %641 = vset.pattern.permute.xlu0 0
    %642 = vperm.xlu0 %641, %v538
    %v643 = vpop.permute.xlu0 %642
    %646 = vset.pattern.permute.xlu0 0
    %647 = vperm.xlu0 %646, %v548
    %v648 = vpop.permute.xlu0 %647
    %651 = vset.pattern.permute.xlu0 0
    %652 = vperm.xlu0 %651, %v558
    %v653 = vpop.permute.xlu0 %652
    %v655 = vmul.f32 %v559, %v578
    %v656 = vmul.f32 %v560, %v583
    %v657 = vmul.f32 %v561, %v588
    %v658 = vmul.f32 %v562, %v593
    %v659 = vmul.f32 %v563, %v598
    %v660 = vmul.f32 %v564, %v603
    %v661 = vmul.f32 %v565, %v608
    %v662 = vmul.f32 %v566, %v613
    %v663 = vmul.f32 %v567, %v618
    %v664 = vmul.f32 %v568, %v623
    %v665 = vmul.f32 %v569, %v628
    %v666 = vmul.f32 %v570, %v633
    %v667 = vmul.f32 %v571, %v638
    %v668 = vmul.f32 %v572, %v643
    %v669 = vmul.f32 %v573, %v648
    %v670 = vmul.f32 %v574, %v653
    %v671 = vld [vmem:[%s2] sm:$0xf]
    %v672 = vld [vmem:[%s2 + $0x4] sm:$0xf]
    %v673 = vld [vmem:[%s2 + $0x8] sm:$0xf]
    %v674 = vld [vmem:[%s2 + $0xc] sm:$0xf]
    %v675 = vld [vmem:[%s2 + $0x10] sm:$0xf]
    %v676 = vld [vmem:[%s2 + $0x14] sm:$0xf]
    %v677 = vld [vmem:[%s2 + $0x18] sm:$0xf]
    %v678 = vld [vmem:[%s2 + $0x1c] sm:$0xf]
    %v679 = vld [vmem:[%s2 + $0x20] sm:$0xf]
    %v680 = vld [vmem:[%s2 + $0x24] sm:$0xf]
    %v681 = vld [vmem:[%s2 + $0x28] sm:$0xf]
    %v682 = vld [vmem:[%s2 + $0x2c] sm:$0xf]
    %v683 = vld [vmem:[%s2 + $0x30] sm:$0xf]
    %v684 = vld [vmem:[%s2 + $0x34] sm:$0xf]
    %v685 = vld [vmem:[%s2 + $0x38] sm:$0xf]
    %v686 = vld [vmem:[%s2 + $0x3c] sm:$0xf]
    %v687 = vunpack.c.l.bf16 %v671
    %v688 = vunpack.c.l.bf16 %v672
    %v689 = vunpack.c.l.bf16 %v673
    %v690 = vunpack.c.l.bf16 %v674
    %v691 = vunpack.c.l.bf16 %v675
    %v692 = vunpack.c.l.bf16 %v676
    %v693 = vunpack.c.l.bf16 %v677
    %v694 = vunpack.c.l.bf16 %v678
    %v695 = vunpack.c.l.bf16 %v679
    %v696 = vunpack.c.l.bf16 %v680
    %v697 = vunpack.c.l.bf16 %v681
    %v698 = vunpack.c.l.bf16 %v682
    %v699 = vunpack.c.l.bf16 %v683
    %v700 = vunpack.c.l.bf16 %v684
    %v701 = vunpack.c.l.bf16 %v685
    %v702 = vunpack.c.l.bf16 %v686
    %v703 = vadd.f32 %v655, %v687
    %v704 = vadd.f32 %v656, %v688
    %v705 = vadd.f32 %v657, %v689
    %v706 = vadd.f32 %v658, %v690
    %v707 = vadd.f32 %v659, %v691
    %v708 = vadd.f32 %v660, %v692
    %v709 = vadd.f32 %v661, %v693
    %v710 = vadd.f32 %v662, %v694
    %v711 = vadd.f32 %v663, %v695
    %v712 = vadd.f32 %v664, %v696
    %v713 = vadd.f32 %v665, %v697
    %v714 = vadd.f32 %v666, %v698
    %v715 = vadd.f32 %v667, %v699
    %v716 = vadd.f32 %v668, %v700
    %v717 = vadd.f32 %v669, %v701
    %v718 = vadd.f32 %v670, %v702
    %v719 = vpack.c.bf16 %v703, %v703
    %v720 = vpack.c.bf16 %v704, %v704
    %v721 = vpack.c.bf16 %v705, %v705
    %v722 = vpack.c.bf16 %v706, %v706
    %v723 = vpack.c.bf16 %v707, %v707
    %v724 = vpack.c.bf16 %v708, %v708
    %v725 = vpack.c.bf16 %v709, %v709
    %v726 = vpack.c.bf16 %v710, %v710
    %v727 = vpack.c.bf16 %v711, %v711
    %v728 = vpack.c.bf16 %v712, %v712
    %v729 = vpack.c.bf16 %v713, %v713
    %v730 = vpack.c.bf16 %v714, %v714
    %v731 = vpack.c.bf16 %v715, %v715
    %v732 = vpack.c.bf16 %v716, %v716
    %v733 = vpack.c.bf16 %v717, %v717
    %v734 = vpack.c.bf16 %v718, %v718
    %735 = vst [vmem:[%s3] sm:$0xf] %v719
    %736 = vst [vmem:[%s3 + $0x4] sm:$0xf] %v720
    %737 = vst [vmem:[%s3 + $0x8] sm:$0xf] %v721
    %738 = vst [vmem:[%s3 + $0xc] sm:$0xf] %v722
    %739 = vst [vmem:[%s3 + $0x10] sm:$0xf] %v723
    %740 = vst [vmem:[%s3 + $0x14] sm:$0xf] %v724
    %741 = vst [vmem:[%s3 + $0x18] sm:$0xf] %v725
    %742 = vst [vmem:[%s3 + $0x1c] sm:$0xf] %v726
    %743 = vst [vmem:[%s3 + $0x20] sm:$0xf] %v727
    %744 = vst [vmem:[%s3 + $0x24] sm:$0xf] %v728
    %745 = vst [vmem:[%s3 + $0x28] sm:$0xf] %v729
    %746 = vst [vmem:[%s3 + $0x2c] sm:$0xf] %v730
    %747 = vst [vmem:[%s3 + $0x30] sm:$0xf] %v731
    %748 = vst [vmem:[%s3 + $0x34] sm:$0xf] %v732
    %749 = vst [vmem:[%s3 + $0x38] sm:$0xf] %v733
    %750 = vst [vmem:[%s3 + $0x3c] sm:$0xf] %v734
  $region21: #{a_call__.5} parent=0 // pred_fallthru
    _
  // Predicated region
  $region22: #{a_call__.5} parent=0 // pred_check
    _
  $region23: #{a_call__.5} parent=0 // pred_check_branch
    %752 = sbr.rel (0) target = $region25
  $region24: #{a_call__.5} parent=0 // pred_region
    _
  $region25: #{a_call__.5} parent=0 // pred_fallthru
    _
  // Predicated region
  $region26: #{a_call__.5} parent=0 // pred_check
    _
  $region27: #{a_call__.5} parent=0 // pred_check_branch
    %754 = sbr.rel (0) target = $region29
  $region28: #{a_call__.5} parent=0 // pred_region
    _
  $region29: #{a_call__.5} parent=0 // pred_fallthru
    _

</llo_original>
